<compile_context>
chip_gen: v5e
topology: v5e:2x2
jax: 0.10.0
libtpu: 0.0.40
codegen_flags: <defaults>
</compile_context>

<pallas_src>
import jax
import jax.numpy as jnp
import numpy as np
from jax.experimental import pallas as pl
from jax.experimental.pallas import tpu as pltpu


def _round_up(x, m):
    return ((x + m - 1) // m) * m


def _make_kernel(B, N, E, compute_dtype, eps=1e-5):
    """Per-call kernel; B, N, E and the compute dtype are static."""
    cdt = compute_dtype
    f32 = jnp.float32

    def dot(a, b):
        return jnp.dot(a.astype(cdt), b.astype(cdt), preferred_element_type=f32)

    def elu(v):
        return jnp.where(v > 0.0, v, jnp.exp(jnp.minimum(v, 0.0)) - 1.0)

    def kernel(*refs):
        x_ref, rr_ref, rs_ref, rrt_ref = refs[:4]
        (m1_w1, m1_b1, m1_w2, m1_b2, m1_g, m1_be,
         m2_w1a, m2_w1b, m2_b1, m2_w2, m2_b2, m2_g, m2_be,
         m3_w1, m3_b1, m3_w2, m3_b2, m3_g, m3_be,
         m4_w1a, m4_w1b, m4_w1c, m4_b1, m4_w2, m4_b2, m4_g, m4_be,
         w_out, b_out) = refs[4:-1]
        o_ref = refs[-1]

        rr = rr_ref[...]     # [E, N]
        rs = rs_ref[...]     # [E, N]
        rrt = rrt_ref[...]   # [N, E]  (rel_rec^T, precomputed in the wrapper)

        def rel_apply(rel, x_flat, rows_in):
            # Apply the shared relation matrix to each batch block of the
            # row-flattened activations; blocks are stacked along rows.
            return jnp.concatenate(
                [dot(rel, x_flat[b * rows_in:(b + 1) * rows_in, :])
                 for b in range(B)], axis=0)

        def mlp(parts, w1s, b1, w2, b2, g, be):
            # Two-layer ELU MLP with training-mode BatchNorm1d over all rows.
            # The concat of `parts` is folded into split matmuls vs w1 blocks.
            pre = b1[...]
            for part, w in zip(parts, w1s):
                pre = pre + dot(part, w[...])
            h = elu(pre)
            h = elu(dot(h, w2[...]) + b2[...])
            mu = jnp.mean(h, axis=0, keepdims=True)
            var = jnp.mean((h - mu) ** 2, axis=0, keepdims=True)
            return (h - mu) * jax.lax.rsqrt(var + eps) * g[...] + be[...]

        x = x_ref[...]                                            # [B*N, n_in]
        x1 = mlp([x], [m1_w1], m1_b1, m1_w2, m1_b2, m1_g, m1_be)  # [B*N, HP]

        rec1 = rel_apply(rr, x1, N)                               # [B*E, HP]
        snd1 = rel_apply(rs, x1, N)
        x2 = mlp([rec1, snd1], [m2_w1a, m2_w1b],
                 m2_b1, m2_w2, m2_b2, m2_g, m2_be)                # [B*E, HP]
        x_skip = x2

        inc = rel_apply(rrt, x2, E) * (1.0 / N)                   # [B*N, HP]
        x3 = mlp([inc], [m3_w1], m3_b1, m3_w2, m3_b2, m3_g, m3_be)

        rec3 = rel_apply(rr, x3, N)
        snd3 = rel_apply(rs, x3, N)
        x4 = mlp([rec3, snd3, x_skip], [m4_w1a, m4_w1b, m4_w1c],
                 m4_b1, m4_w2, m4_b2, m4_g, m4_be)                # [B*E, HP]

        # Lane-dense (128-multiple) output store; padding sliced off outside.
        o_ref[...] = dot(x4, w_out[...]) + b_out[...]

    return kernel


def graph_encoder_forward(inputs, rel_rec, rel_send, params, *,
                          compute_dtype=jnp.float32):
    """Pallas implementation of GraphEncoder.forward."""
    B, N, n_in = inputs.shape
    E = rel_rec.shape[0]
    H = params["m1_w2"].shape[0]
    n_out = params["wout"].shape[1]
    HP = _round_up(H, 128)        # lane-dense hidden width
    OUTP = _round_up(n_out, 128)  # lane-dense output width
    cdt = compute_dtype
    f32 = jnp.float32

    def pw(w, rows, cols):  # zero-pad a weight and cast to the compute dtype
        return jnp.pad(w, ((0, rows - w.shape[0]),
                           (0, cols - w.shape[1]))).astype(cdt)

    def pv(v, cols, fill=0.0):  # pad a vector to [1, cols]; stays f32
        return jnp.pad(v.reshape(1, -1), ((0, 0), (0, cols - v.shape[-1])),
                       constant_values=fill).astype(f32)

    p = params
    wargs = (
        # mlp1
        pw(p["m1_w1"], n_in, HP), pv(p["m1_b1"], HP),
        pw(p["m1_w2"], HP, HP), pv(p["m1_b2"], HP),
        pv(p["m1_g"], HP, 1.0), pv(p["m1_be"], HP),
        # mlp2 (fc1 split into receiver / sender halves -> concat folded away)
        pw(p["m2_w1"][:H], HP, HP), pw(p["m2_w1"][H:], HP, HP),
        pv(p["m2_b1"], HP),
        pw(p["m2_w2"], HP, HP), pv(p["m2_b2"], HP),
        pv(p["m2_g"], HP, 1.0), pv(p["m2_be"], HP),
        # mlp3
        pw(p["m3_w1"], HP, HP), pv(p["m3_b1"], HP),
        pw(p["m3_w2"], HP, HP), pv(p["m3_b2"], HP),
        pv(p["m3_g"], HP, 1.0), pv(p["m3_be"], HP),
        # mlp4 (fc1 split into receiver / sender / skip thirds)
        pw(p["m4_w1"][:H], HP, HP), pw(p["m4_w1"][H:2 * H], HP, HP),
        pw(p["m4_w1"][2 * H:], HP, HP),
        pv(p["m4_b1"], HP),
        pw(p["m4_w2"], HP, HP), pv(p["m4_b2"], HP),
        pv(p["m4_g"], HP, 1.0), pv(p["m4_be"], HP),
        # fc_out
        pw(p["wout"], HP, OUTP), pv(p["bout"], OUTP),
    )

    x_flat = inputs.reshape(B * N, n_in).astype(cdt)
    args = (x_flat, rel_rec.astype(cdt), rel_send.astype(cdt),
            rel_rec.T.astype(cdt)) + wargs

    in_specs = [pl.BlockSpec(a.shape, lambda i: (0, 0)) for a in args]

    grid_spec = pltpu.PrefetchScalarGridSpec(
        num_scalar_prefetch=0,
        grid=(1,),  # whole batch in one step (training-mode BN statistics)
        in_specs=in_specs,
        out_specs=pl.BlockSpec((B * E, OUTP), lambda i: (0, 0)),
    )

    out = pl.pallas_call(
        _make_kernel(B, N, E, cdt),
        out_shape=jax.ShapeDtypeStruct((B * E, OUTP), f32),
        grid_spec=grid_spec,
        compiler_params=pltpu.CompilerParams(
            dimension_semantics=("arbitrary",),
            vmem_limit_bytes=32 * 1024 * 1024),
    )(*args)

    return out.reshape(B, E, OUTP)[:, :, :n_out]


def init_params(key, n_in, n_hid, n_out, num_nodes):
    """Deterministic synthetic parameters (weights stored as [in, out])."""
    H = n_hid
    k = jax.random.split(key, 26)

    def W(kk, fin, fout, scale):
        return scale * jax.random.normal(kk, (fin, fout), jnp.float32)

    def V(kk, n, scale=0.1):
        return scale * jax.random.normal(kk, (n,), jnp.float32)

    he = lambda fin: float(np.sqrt(2.0 / fin))
    return dict(
        m1_w1=W(k[0], n_in, H, he(n_in)), m1_b1=V(k[1], H),
        m1_w2=W(k[2], H, H, he(H)), m1_b2=V(k[3], H),
        m1_g=1.0 + V(k[4], H), m1_be=V(k[5], H),
        m2_w1=W(k[6], 2 * H, H, he(2 * H)), m2_b1=V(k[7], H),
        m2_w2=W(k[8], H, H, he(H)), m2_b2=V(k[9], H),
        m2_g=1.0 + V(k[10], H), m2_be=V(k[11], H),
        # edge2node divides by num_nodes; scale m3_w1 up so the BN input
        # variance stays healthy (keeps the check well conditioned).
        m3_w1=W(k[12], H, H, num_nodes * he(H)), m3_b1=V(k[13], H),
        m3_w2=W(k[14], H, H, he(H)), m3_b2=V(k[15], H),
        m3_g=1.0 + V(k[16], H), m3_be=V(k[17], H),
        m4_w1=W(k[18], 3 * H, H, he(3 * H)), m4_b1=V(k[19], H),
        m4_w2=W(k[20], H, H, he(H)), m4_b2=V(k[21], H),
        m4_g=1.0 + V(k[22], H), m4_be=V(k[23], H),
        wout=W(k[24], H, n_out, he(H)), bout=V(k[25], n_out),
    )


def reference_forward(inputs, rel_rec, rel_send, p, *,
                      compute_dtype=jnp.float32, eps=1e-5):
    """Pure-JAX reference matching the PyTorch module (factor=True, do_prob=0,
    training-mode BatchNorm).  compute_dtype mirrors the kernel's operand
    quantization points (f32 accumulation everywhere)."""
    cdt = compute_dtype
    f32 = jnp.float32

    def dot(a, w):
        return jnp.einsum("brf,fh->brh", a.astype(cdt), w.astype(cdt),
                          preferred_element_type=f32)

    def rel_apply(rel, x):
        return jnp.einsum("en,bnf->bef", rel.astype(cdt), x.astype(cdt),
                          preferred_element_type=f32)

    def elu(v):
        return jnp.where(v > 0.0, v, jnp.exp(jnp.minimum(v, 0.0)) - 1.0)

    def mlp(x, w1, b1, w2, b2, g, be):
        h = elu(dot(x, w1) + b1)
        h = elu(dot(h, w2) + b2)
        Bb, R, F = h.shape
        hf = h.reshape(Bb * R, F)
        mu = jnp.mean(hf, axis=0, keepdims=True)
        var = jnp.mean((hf - mu) ** 2, axis=0, keepdims=True)
        hf = (hf - mu) * jax.lax.rsqrt(var + eps) * g + be
        return hf.reshape(Bb, R, F)

    x = mlp(inputs, p["m1_w1"], p["m1_b1"], p["m1_w2"], p["m1_b2"],
            p["m1_g"], p["m1_be"])
    rec = rel_apply(rel_rec, x)
    snd = rel_apply(rel_send, x)
    x = mlp(jnp.concatenate([rec, snd], -1), p["m2_w1"], p["m2_b1"],
            p["m2_w2"], p["m2_b2"], p["m2_g"], p["m2_be"])
    x_skip = x
    inc = jnp.einsum("en,bef->bnf", rel_rec.astype(cdt), x.astype(cdt),
                     preferred_element_type=f32)
    x = inc / inc.shape[1]
    x = mlp(x, p["m3_w1"], p["m3_b1"], p["m3_w2"], p["m3_b2"],
            p["m3_g"], p["m3_be"])
    rec = rel_apply(rel_rec, x)
    snd = rel_apply(rel_send, x)
    x = mlp(jnp.concatenate([rec, snd, x_skip], -1), p["m4_w1"], p["m4_b1"],
            p["m4_w2"], p["m4_b2"], p["m4_g"], p["m4_be"])
    return dot(x, p["wout"]) + p["bout"]


if __name__ == "__main__":
    # Small shapes consistent with the module's forward:
    #   inputs [B, N, n_in], rel_rec / rel_send [E, N] (one-hot), out [B, E, n_out]
    B, N, n_in = 2, 8, 4
    E = 16
    n_hid, n_out = 32, 4

    key = jax.random.PRNGKey(0)
    k_in, k_rec, k_send, k_par = jax.random.split(key, 4)

    inputs = jax.random.normal(k_in, (B, N, n_in), jnp.float32)
    recv_idx = jax.random.randint(k_rec, (E,), 0, N)
    send_idx = jax.random.randint(k_send, (E,), 0, N)
    rel_rec = jax.nn.one_hot(recv_idx, N, dtype=jnp.float32)
    rel_send = jax.nn.one_hot(send_idx, N, dtype=jnp.float32)

    params = init_params(k_par, n_in, n_hid, n_out, N)

    # f32 path.
    out_f32 = jax.block_until_ready(
        graph_encoder_forward(inputs, rel_rec, rel_send, params))

    # References computed with true-f32 matmuls (avoids XLA's default bf16
    # matmul passes on TPU for the f32 comparison).
    with jax.default_matmul_precision("float32"):
        ref_f32 = jax.block_until_ready(
            reference_forward(inputs, rel_rec, rel_send, params))
        ref_bf16 = jax.block_until_ready(
            reference_forward(inputs, rel_rec, rel_send, params,
                              compute_dtype=jnp.bfloat16))

    # In practice the all-f32 path matches to ~1e-4; the bound is kept
    # conservative because BatchNorm's 1/sigma amplifies any difference in
    # default f32-matmul precision between the MXU and the XLA reference.
    np.testing.assert_allclose(np.asarray(out_f32), np.asarray(ref_f32),
                               rtol=2e-2, atol=2e-2)

    # bf16-operand fast path (v6e/v7x MXU), checked against the
    # quantization-matched reference (same bf16 cast points, f32 accumulation).
    out_bf16 = jax.block_until_ready(
        graph_encoder_forward(inputs, rel_rec, rel_send, params,
                              compute_dtype=jnp.bfloat16))
    np.testing.assert_allclose(np.asarray(out_bf16), np.asarray(ref_bf16),
                               rtol=1e-2, atol=1e-2)

    print("KERNEL_OK")
</pallas_src>

<mosaic_0001>
module attributes {stable_mosaic.version = 11 : i64} {
  func.func @kernel(%arg0: i32, %arg1: memref<16x4xf32, #tpu.memory_space<vmem>>, %arg2: memref<16x8xf32, #tpu.memory_space<vmem>>, %arg3: memref<16x8xf32, #tpu.memory_space<vmem>>, %arg4: memref<8x16xf32, #tpu.memory_space<vmem>>, %arg5: memref<4x128xf32, #tpu.memory_space<vmem>>, %arg6: memref<1x128xf32, #tpu.memory_space<vmem>>, %arg7: memref<128x128xf32, #tpu.memory_space<vmem>>, %arg8: memref<1x128xf32, #tpu.memory_space<vmem>>, %arg9: memref<1x128xf32, #tpu.memory_space<vmem>>, %arg10: memref<1x128xf32, #tpu.memory_space<vmem>>, %arg11: memref<128x128xf32, #tpu.memory_space<vmem>>, %arg12: memref<128x128xf32, #tpu.memory_space<vmem>>, %arg13: memref<1x128xf32, #tpu.memory_space<vmem>>, %arg14: memref<128x128xf32, #tpu.memory_space<vmem>>, %arg15: memref<1x128xf32, #tpu.memory_space<vmem>>, %arg16: memref<1x128xf32, #tpu.memory_space<vmem>>, %arg17: memref<1x128xf32, #tpu.memory_space<vmem>>, %arg18: memref<128x128xf32, #tpu.memory_space<vmem>>, %arg19: memref<1x128xf32, #tpu.memory_space<vmem>>, %arg20: memref<128x128xf32, #tpu.memory_space<vmem>>, %arg21: memref<1x128xf32, #tpu.memory_space<vmem>>, %arg22: memref<1x128xf32, #tpu.memory_space<vmem>>, %arg23: memref<1x128xf32, #tpu.memory_space<vmem>>, %arg24: memref<128x128xf32, #tpu.memory_space<vmem>>, %arg25: memref<128x128xf32, #tpu.memory_space<vmem>>, %arg26: memref<128x128xf32, #tpu.memory_space<vmem>>, %arg27: memref<1x128xf32, #tpu.memory_space<vmem>>, %arg28: memref<128x128xf32, #tpu.memory_space<vmem>>, %arg29: memref<1x128xf32, #tpu.memory_space<vmem>>, %arg30: memref<1x128xf32, #tpu.memory_space<vmem>>, %arg31: memref<1x128xf32, #tpu.memory_space<vmem>>, %arg32: memref<128x128xf32, #tpu.memory_space<vmem>>, %arg33: memref<1x128xf32, #tpu.memory_space<vmem>>, %arg34: memref<32x128xf32, #tpu.memory_space<vmem>>) attributes {dimension_semantics = [#tpu.dimension_semantics<arbitrary>], iteration_bounds = array<i64: 1>, scalar_prefetch = 0 : i64, scratch_operands = 0 : i64, tpu.core_type = #tpu.core_type<tc>, window_params = [{pipeline_mode = #tpu.pipeline_mode<synchronous>, transform_indices = @transform_0, window_bounds = array<i64: 16, 4>}, {pipeline_mode = #tpu.pipeline_mode<synchronous>, transform_indices = @transform_1, window_bounds = array<i64: 16, 8>}, {pipeline_mode = #tpu.pipeline_mode<synchronous>, transform_indices = @transform_2, window_bounds = array<i64: 16, 8>}, {pipeline_mode = #tpu.pipeline_mode<synchronous>, transform_indices = @transform_3, window_bounds = array<i64: 8, 16>}, {pipeline_mode = #tpu.pipeline_mode<synchronous>, transform_indices = @transform_4, window_bounds = array<i64: 4, 128>}, {pipeline_mode = #tpu.pipeline_mode<synchronous>, transform_indices = @transform_5, window_bounds = array<i64: 1, 128>}, {pipeline_mode = #tpu.pipeline_mode<synchronous>, transform_indices = @transform_6, window_bounds = array<i64: 128, 128>}, {pipeline_mode = #tpu.pipeline_mode<synchronous>, transform_indices = @transform_7, window_bounds = array<i64: 1, 128>}, {pipeline_mode = #tpu.pipeline_mode<synchronous>, transform_indices = @transform_8, window_bounds = array<i64: 1, 128>}, {pipeline_mode = #tpu.pipeline_mode<synchronous>, transform_indices = @transform_9, window_bounds = array<i64: 1, 128>}, {pipeline_mode = #tpu.pipeline_mode<synchronous>, transform_indices = @transform_10, window_bounds = array<i64: 128, 128>}, {pipeline_mode = #tpu.pipeline_mode<synchronous>, transform_indices = @transform_11, window_bounds = array<i64: 128, 128>}, {pipeline_mode = #tpu.pipeline_mode<synchronous>, transform_indices = @transform_12, window_bounds = array<i64: 1, 128>}, {pipeline_mode = #tpu.pipeline_mode<synchronous>, transform_indices = @transform_13, window_bounds = array<i64: 128, 128>}, {pipeline_mode = #tpu.pipeline_mode<synchronous>, transform_indices = @transform_14, window_bounds = array<i64: 1, 128>}, {pipeline_mode = #tpu.pipeline_mode<synchronous>, transform_indices = @transform_15, window_bounds = array<i64: 1, 128>}, {pipeline_mode = #tpu.pipeline_mode<synchronous>, transform_indices = @transform_16, window_bounds = array<i64: 1, 128>}, {pipeline_mode = #tpu.pipeline_mode<synchronous>, transform_indices = @transform_17, window_bounds = array<i64: 128, 128>}, {pipeline_mode = #tpu.pipeline_mode<synchronous>, transform_indices = @transform_18, window_bounds = array<i64: 1, 128>}, {pipeline_mode = #tpu.pipeline_mode<synchronous>, transform_indices = @transform_19, window_bounds = array<i64: 128, 128>}, {pipeline_mode = #tpu.pipeline_mode<synchronous>, transform_indices = @transform_20, window_bounds = array<i64: 1, 128>}, {pipeline_mode = #tpu.pipeline_mode<synchronous>, transform_indices = @transform_21, window_bounds = array<i64: 1, 128>}, {pipeline_mode = #tpu.pipeline_mode<synchronous>, transform_indices = @transform_22, window_bounds = array<i64: 1, 128>}, {pipeline_mode = #tpu.pipeline_mode<synchronous>, transform_indices = @transform_23, window_bounds = array<i64: 128, 128>}, {pipeline_mode = #tpu.pipeline_mode<synchronous>, transform_indices = @transform_24, window_bounds = array<i64: 128, 128>}, {pipeline_mode = #tpu.pipeline_mode<synchronous>, transform_indices = @transform_25, window_bounds = array<i64: 128, 128>}, {pipeline_mode = #tpu.pipeline_mode<synchronous>, transform_indices = @transform_26, window_bounds = array<i64: 1, 128>}, {pipeline_mode = #tpu.pipeline_mode<synchronous>, transform_indices = @transform_27, window_bounds = array<i64: 128, 128>}, {pipeline_mode = #tpu.pipeline_mode<synchronous>, transform_indices = @transform_28, window_bounds = array<i64: 1, 128>}, {pipeline_mode = #tpu.pipeline_mode<synchronous>, transform_indices = @transform_29, window_bounds = array<i64: 1, 128>}, {pipeline_mode = #tpu.pipeline_mode<synchronous>, transform_indices = @transform_30, window_bounds = array<i64: 1, 128>}, {pipeline_mode = #tpu.pipeline_mode<synchronous>, transform_indices = @transform_31, window_bounds = array<i64: 128, 128>}, {pipeline_mode = #tpu.pipeline_mode<synchronous>, transform_indices = @transform_32, window_bounds = array<i64: 1, 128>}, {pipeline_mode = #tpu.pipeline_mode<synchronous>, transform_indices = @transform_33, window_bounds = array<i64: 32, 128>}]} {
    %c0 = arith.constant 0 : index
    %c0_0 = arith.constant 0 : index
    %0 = vector.load %arg2[%c0, %c0_0] : memref<16x8xf32, #tpu.memory_space<vmem>>, vector<16x8xf32>
    %c0_1 = arith.constant 0 : index
    %c0_2 = arith.constant 0 : index
    %1 = vector.load %arg3[%c0_1, %c0_2] : memref<16x8xf32, #tpu.memory_space<vmem>>, vector<16x8xf32>
    %c0_3 = arith.constant 0 : index
    %c0_4 = arith.constant 0 : index
    %2 = vector.load %arg4[%c0_3, %c0_4] : memref<8x16xf32, #tpu.memory_space<vmem>>, vector<8x16xf32>
    %c0_5 = arith.constant 0 : index
    %c0_6 = arith.constant 0 : index
    %3 = vector.load %arg1[%c0_5, %c0_6] : memref<16x4xf32, #tpu.memory_space<vmem>>, vector<16x4xf32>
    %c0_7 = arith.constant 0 : index
    %c0_8 = arith.constant 0 : index
    %4 = vector.load %arg6[%c0_7, %c0_8] : memref<1x128xf32, #tpu.memory_space<vmem>>, vector<1x128xf32>
    %c0_9 = arith.constant 0 : index
    %c0_10 = arith.constant 0 : index
    %5 = vector.load %arg5[%c0_9, %c0_10] : memref<4x128xf32, #tpu.memory_space<vmem>>, vector<4x128xf32>
    %cst = arith.constant dense<0.000000e+00> : vector<16x128xf32>
    %6 = tpu.matmul %3, %5, %cst {dimension_numbers = #tpu.dot_dimension_numbers<[1], [0], [0], [1], [0, 0, 1, 1], [], []>} : vector<16x4xf32>, vector<4x128xf32>, vector<16x128xf32> -> vector<16x128xf32>
    %7 = vector.broadcast %4 : vector<1x128xf32> to vector<16x128xf32>
    %8 = arith.addf %7, %6 : vector<16x128xf32>
    %cst_11 = arith.constant 0.000000e+00 : f32
    %9 = vector.broadcast %cst_11 : f32 to vector<16x128xf32>
    %10 = arith.cmpf ogt, %8, %9 : vector<16x128xf32>
    %cst_12 = arith.constant 0.000000e+00 : f32
    %11 = vector.broadcast %cst_12 : f32 to vector<16x128xf32>
    %12 = arith.minimumf %8, %11 : vector<16x128xf32>
    %13 = math.exp %12 : vector<16x128xf32>
    %cst_13 = arith.constant 1.000000e+00 : f32
    %14 = vector.broadcast %cst_13 : f32 to vector<16x128xf32>
    %15 = arith.subf %13, %14 : vector<16x128xf32>
    %16 = arith.select %10, %8, %15 : vector<16x128xi1>, vector<16x128xf32>
    %c0_14 = arith.constant 0 : index
    %c0_15 = arith.constant 0 : index
    %17 = vector.load %arg7[%c0_14, %c0_15] : memref<128x128xf32, #tpu.memory_space<vmem>>, vector<128x128xf32>
    %cst_16 = arith.constant dense<0.000000e+00> : vector<16x128xf32>
    %18 = tpu.matmul %16, %17, %cst_16 {dimension_numbers = #tpu.dot_dimension_numbers<[1], [0], [0], [1], [0, 0, 1, 1], [], []>} : vector<16x128xf32>, vector<128x128xf32>, vector<16x128xf32> -> vector<16x128xf32>
    %c0_17 = arith.constant 0 : index
    %c0_18 = arith.constant 0 : index
    %19 = vector.load %arg8[%c0_17, %c0_18] : memref<1x128xf32, #tpu.memory_space<vmem>>, vector<1x128xf32>
    %20 = vector.broadcast %19 : vector<1x128xf32> to vector<16x128xf32>
    %21 = arith.addf %18, %20 : vector<16x128xf32>
    %cst_19 = arith.constant 0.000000e+00 : f32
    %22 = vector.broadcast %cst_19 : f32 to vector<16x128xf32>
    %23 = arith.cmpf ogt, %21, %22 : vector<16x128xf32>
    %cst_20 = arith.constant 0.000000e+00 : f32
    %24 = vector.broadcast %cst_20 : f32 to vector<16x128xf32>
    %25 = arith.minimumf %21, %24 : vector<16x128xf32>
    %26 = math.exp %25 : vector<16x128xf32>
    %cst_21 = arith.constant 1.000000e+00 : f32
    %27 = vector.broadcast %cst_21 : f32 to vector<16x128xf32>
    %28 = arith.subf %26, %27 : vector<16x128xf32>
    %29 = arith.select %23, %21, %28 : vector<16x128xi1>, vector<16x128xf32>
    %cst_22 = arith.constant dense<0.000000e+00> : vector<128xf32>
    %30 = vector.multi_reduction <add>, %29, %cst_22 [0] : vector<16x128xf32> to vector<128xf32>
    %31 = vector.shape_cast %30 : vector<128xf32> to vector<1x128xf32>
    %cst_23 = arith.constant 1.600000e+01 : f32
    %32 = vector.broadcast %cst_23 : f32 to vector<1x128xf32>
    %33 = arith.divf %31, %32 : vector<1x128xf32>
    %34 = vector.broadcast %33 : vector<1x128xf32> to vector<16x128xf32>
    %35 = arith.subf %29, %34 : vector<16x128xf32>
    %36 = arith.mulf %35, %35 : vector<16x128xf32>
    %cst_24 = arith.constant dense<0.000000e+00> : vector<128xf32>
    %37 = vector.multi_reduction <add>, %36, %cst_24 [0] : vector<16x128xf32> to vector<128xf32>
    %38 = vector.shape_cast %37 : vector<128xf32> to vector<1x128xf32>
    %cst_25 = arith.constant 1.600000e+01 : f32
    %39 = vector.broadcast %cst_25 : f32 to vector<1x128xf32>
    %40 = arith.divf %38, %39 : vector<1x128xf32>
    %41 = vector.broadcast %33 : vector<1x128xf32> to vector<16x128xf32>
    %42 = arith.subf %29, %41 : vector<16x128xf32>
    %cst_26 = arith.constant 9.99999974E-6 : f32
    %43 = vector.broadcast %cst_26 : f32 to vector<1x128xf32>
    %44 = arith.addf %40, %43 : vector<1x128xf32>
    %45 = math.rsqrt %44 : vector<1x128xf32>
    %46 = vector.broadcast %45 : vector<1x128xf32> to vector<16x128xf32>
    %47 = arith.mulf %42, %46 : vector<16x128xf32>
    %c0_27 = arith.constant 0 : index
    %c0_28 = arith.constant 0 : index
    %48 = vector.load %arg9[%c0_27, %c0_28] : memref<1x128xf32, #tpu.memory_space<vmem>>, vector<1x128xf32>
    %49 = vector.broadcast %48 : vector<1x128xf32> to vector<16x128xf32>
    %50 = arith.mulf %47, %49 : vector<16x128xf32>
    %c0_29 = arith.constant 0 : index
    %c0_30 = arith.constant 0 : index
    %51 = vector.load %arg10[%c0_29, %c0_30] : memref<1x128xf32, #tpu.memory_space<vmem>>, vector<1x128xf32>
    %52 = vector.broadcast %51 : vector<1x128xf32> to vector<16x128xf32>
    %53 = arith.addf %50, %52 : vector<16x128xf32>
    %54 = vector.extract_strided_slice %53 {offsets = [0, 0], sizes = [8, 128], strides = [1, 1]} : vector<16x128xf32> to vector<8x128xf32>
    %cst_31 = arith.constant dense<0.000000e+00> : vector<16x128xf32>
    %55 = tpu.matmul %0, %54, %cst_31 {dimension_numbers = #tpu.dot_dimension_numbers<[1], [0], [0], [1], [0, 0, 1, 1], [], []>} : vector<16x8xf32>, vector<8x128xf32>, vector<16x128xf32> -> vector<16x128xf32>
    %56 = vector.extract_strided_slice %53 {offsets = [8, 0], sizes = [8, 128], strides = [1, 1]} : vector<16x128xf32> to vector<8x128xf32>
    %cst_32 = arith.constant dense<0.000000e+00> : vector<16x128xf32>
    %57 = tpu.matmul %0, %56, %cst_32 {dimension_numbers = #tpu.dot_dimension_numbers<[1], [0], [0], [1], [0, 0, 1, 1], [], []>} : vector<16x8xf32>, vector<8x128xf32>, vector<16x128xf32> -> vector<16x128xf32>
    %58 = tpu.concatenate %55, %57 in 0 : vector<16x128xf32>, vector<16x128xf32> -> vector<32x128xf32>
    %59 = vector.extract_strided_slice %53 {offsets = [0, 0], sizes = [8, 128], strides = [1, 1]} : vector<16x128xf32> to vector<8x128xf32>
    %cst_33 = arith.constant dense<0.000000e+00> : vector<16x128xf32>
    %60 = tpu.matmul %1, %59, %cst_33 {dimension_numbers = #tpu.dot_dimension_numbers<[1], [0], [0], [1], [0, 0, 1, 1], [], []>} : vector<16x8xf32>, vector<8x128xf32>, vector<16x128xf32> -> vector<16x128xf32>
    %61 = vector.extract_strided_slice %53 {offsets = [8, 0], sizes = [8, 128], strides = [1, 1]} : vector<16x128xf32> to vector<8x128xf32>
    %cst_34 = arith.constant dense<0.000000e+00> : vector<16x128xf32>
    %62 = tpu.matmul %1, %61, %cst_34 {dimension_numbers = #tpu.dot_dimension_numbers<[1], [0], [0], [1], [0, 0, 1, 1], [], []>} : vector<16x8xf32>, vector<8x128xf32>, vector<16x128xf32> -> vector<16x128xf32>
    %63 = tpu.concatenate %60, %62 in 0 : vector<16x128xf32>, vector<16x128xf32> -> vector<32x128xf32>
    %c0_35 = arith.constant 0 : index
    %c0_36 = arith.constant 0 : index
    %64 = vector.load %arg13[%c0_35, %c0_36] : memref<1x128xf32, #tpu.memory_space<vmem>>, vector<1x128xf32>
    %c0_37 = arith.constant 0 : index
    %c0_38 = arith.constant 0 : index
    %65 = vector.load %arg11[%c0_37, %c0_38] : memref<128x128xf32, #tpu.memory_space<vmem>>, vector<128x128xf32>
    %cst_39 = arith.constant dense<0.000000e+00> : vector<32x128xf32>
    %66 = tpu.matmul %58, %65, %cst_39 {dimension_numbers = #tpu.dot_dimension_numbers<[1], [0], [0], [1], [0, 0, 1, 1], [], []>} : vector<32x128xf32>, vector<128x128xf32>, vector<32x128xf32> -> vector<32x128xf32>
    %67 = vector.broadcast %64 : vector<1x128xf32> to vector<32x128xf32>
    %68 = arith.addf %67, %66 : vector<32x128xf32>
    %c0_40 = arith.constant 0 : index
    %c0_41 = arith.constant 0 : index
    %69 = vector.load %arg12[%c0_40, %c0_41] : memref<128x128xf32, #tpu.memory_space<vmem>>, vector<128x128xf32>
    %cst_42 = arith.constant dense<0.000000e+00> : vector<32x128xf32>
    %70 = tpu.matmul %63, %69, %cst_42 {dimension_numbers = #tpu.dot_dimension_numbers<[1], [0], [0], [1], [0, 0, 1, 1], [], []>} : vector<32x128xf32>, vector<128x128xf32>, vector<32x128xf32> -> vector<32x128xf32>
    %71 = arith.addf %68, %70 : vector<32x128xf32>
    %cst_43 = arith.constant 0.000000e+00 : f32
    %72 = vector.broadcast %cst_43 : f32 to vector<32x128xf32>
    %73 = arith.cmpf ogt, %71, %72 : vector<32x128xf32>
    %cst_44 = arith.constant 0.000000e+00 : f32
    %74 = vector.broadcast %cst_44 : f32 to vector<32x128xf32>
    %75 = arith.minimumf %71, %74 : vector<32x128xf32>
    %76 = math.exp %75 : vector<32x128xf32>
    %cst_45 = arith.constant 1.000000e+00 : f32
    %77 = vector.broadcast %cst_45 : f32 to vector<32x128xf32>
    %78 = arith.subf %76, %77 : vector<32x128xf32>
    %79 = arith.select %73, %71, %78 : vector<32x128xi1>, vector<32x128xf32>
    %c0_46 = arith.constant 0 : index
    %c0_47 = arith.constant 0 : index
    %80 = vector.load %arg14[%c0_46, %c0_47] : memref<128x128xf32, #tpu.memory_space<vmem>>, vector<128x128xf32>
    %cst_48 = arith.constant dense<0.000000e+00> : vector<32x128xf32>
    %81 = tpu.matmul %79, %80, %cst_48 {dimension_numbers = #tpu.dot_dimension_numbers<[1], [0], [0], [1], [0, 0, 1, 1], [], []>} : vector<32x128xf32>, vector<128x128xf32>, vector<32x128xf32> -> vector<32x128xf32>
    %c0_49 = arith.constant 0 : index
    %c0_50 = arith.constant 0 : index
    %82 = vector.load %arg15[%c0_49, %c0_50] : memref<1x128xf32, #tpu.memory_space<vmem>>, vector<1x128xf32>
    %83 = vector.broadcast %82 : vector<1x128xf32> to vector<32x128xf32>
    %84 = arith.addf %81, %83 : vector<32x128xf32>
    %cst_51 = arith.constant 0.000000e+00 : f32
    %85 = vector.broadcast %cst_51 : f32 to vector<32x128xf32>
    %86 = arith.cmpf ogt, %84, %85 : vector<32x128xf32>
    %cst_52 = arith.constant 0.000000e+00 : f32
    %87 = vector.broadcast %cst_52 : f32 to vector<32x128xf32>
    %88 = arith.minimumf %84, %87 : vector<32x128xf32>
    %89 = math.exp %88 : vector<32x128xf32>
    %cst_53 = arith.constant 1.000000e+00 : f32
    %90 = vector.broadcast %cst_53 : f32 to vector<32x128xf32>
    %91 = arith.subf %89, %90 : vector<32x128xf32>
    %92 = arith.select %86, %84, %91 : vector<32x128xi1>, vector<32x128xf32>
    %cst_54 = arith.constant dense<0.000000e+00> : vector<128xf32>
    %93 = vector.multi_reduction <add>, %92, %cst_54 [0] : vector<32x128xf32> to vector<128xf32>
    %94 = vector.shape_cast %93 : vector<128xf32> to vector<1x128xf32>
    %cst_55 = arith.constant 3.200000e+01 : f32
    %95 = vector.broadcast %cst_55 : f32 to vector<1x128xf32>
    %96 = arith.divf %94, %95 : vector<1x128xf32>
    %97 = vector.broadcast %96 : vector<1x128xf32> to vector<32x128xf32>
    %98 = arith.subf %92, %97 : vector<32x128xf32>
    %99 = arith.mulf %98, %98 : vector<32x128xf32>
    %cst_56 = arith.constant dense<0.000000e+00> : vector<128xf32>
    %100 = vector.multi_reduction <add>, %99, %cst_56 [0] : vector<32x128xf32> to vector<128xf32>
    %101 = vector.shape_cast %100 : vector<128xf32> to vector<1x128xf32>
    %cst_57 = arith.constant 3.200000e+01 : f32
    %102 = vector.broadcast %cst_57 : f32 to vector<1x128xf32>
    %103 = arith.divf %101, %102 : vector<1x128xf32>
    %104 = vector.broadcast %96 : vector<1x128xf32> to vector<32x128xf32>
    %105 = arith.subf %92, %104 : vector<32x128xf32>
    %cst_58 = arith.constant 9.99999974E-6 : f32
    %106 = vector.broadcast %cst_58 : f32 to vector<1x128xf32>
    %107 = arith.addf %103, %106 : vector<1x128xf32>
    %108 = math.rsqrt %107 : vector<1x128xf32>
    %109 = vector.broadcast %108 : vector<1x128xf32> to vector<32x128xf32>
    %110 = arith.mulf %105, %109 : vector<32x128xf32>
    %c0_59 = arith.constant 0 : index
    %c0_60 = arith.constant 0 : index
    %111 = vector.load %arg16[%c0_59, %c0_60] : memref<1x128xf32, #tpu.memory_space<vmem>>, vector<1x128xf32>
    %112 = vector.broadcast %111 : vector<1x128xf32> to vector<32x128xf32>
    %113 = arith.mulf %110, %112 : vector<32x128xf32>
    %c0_61 = arith.constant 0 : index
    %c0_62 = arith.constant 0 : index
    %114 = vector.load %arg17[%c0_61, %c0_62] : memref<1x128xf32, #tpu.memory_space<vmem>>, vector<1x128xf32>
    %115 = vector.broadcast %114 : vector<1x128xf32> to vector<32x128xf32>
    %116 = arith.addf %113, %115 : vector<32x128xf32>
    %117 = vector.extract_strided_slice %116 {offsets = [0, 0], sizes = [16, 128], strides = [1, 1]} : vector<32x128xf32> to vector<16x128xf32>
    %cst_63 = arith.constant dense<0.000000e+00> : vector<8x128xf32>
    %118 = tpu.matmul %2, %117, %cst_63 {dimension_numbers = #tpu.dot_dimension_numbers<[1], [0], [0], [1], [0, 0, 1, 1], [], []>} : vector<8x16xf32>, vector<16x128xf32>, vector<8x128xf32> -> vector<8x128xf32>
    %119 = vector.extract_strided_slice %116 {offsets = [16, 0], sizes = [16, 128], strides = [1, 1]} : vector<32x128xf32> to vector<16x128xf32>
    %cst_64 = arith.constant dense<0.000000e+00> : vector<8x128xf32>
    %120 = tpu.matmul %2, %119, %cst_64 {dimension_numbers = #tpu.dot_dimension_numbers<[1], [0], [0], [1], [0, 0, 1, 1], [], []>} : vector<8x16xf32>, vector<16x128xf32>, vector<8x128xf32> -> vector<8x128xf32>
    %121 = tpu.concatenate %118, %120 in 0 : vector<8x128xf32>, vector<8x128xf32> -> vector<16x128xf32>
    %cst_65 = arith.constant 1.250000e-01 : f32
    %122 = vector.broadcast %cst_65 : f32 to vector<16x128xf32>
    %123 = arith.mulf %121, %122 : vector<16x128xf32>
    %c0_66 = arith.constant 0 : index
    %c0_67 = arith.constant 0 : index
    %124 = vector.load %arg19[%c0_66, %c0_67] : memref<1x128xf32, #tpu.memory_space<vmem>>, vector<1x128xf32>
    %c0_68 = arith.constant 0 : index
    %c0_69 = arith.constant 0 : index
    %125 = vector.load %arg18[%c0_68, %c0_69] : memref<128x128xf32, #tpu.memory_space<vmem>>, vector<128x128xf32>
    %cst_70 = arith.constant dense<0.000000e+00> : vector<16x128xf32>
    %126 = tpu.matmul %123, %125, %cst_70 {dimension_numbers = #tpu.dot_dimension_numbers<[1], [0], [0], [1], [0, 0, 1, 1], [], []>} : vector<16x128xf32>, vector<128x128xf32>, vector<16x128xf32> -> vector<16x128xf32>
    %127 = vector.broadcast %124 : vector<1x128xf32> to vector<16x128xf32>
    %128 = arith.addf %127, %126 : vector<16x128xf32>
    %cst_71 = arith.constant 0.000000e+00 : f32
    %129 = vector.broadcast %cst_71 : f32 to vector<16x128xf32>
    %130 = arith.cmpf ogt, %128, %129 : vector<16x128xf32>
    %cst_72 = arith.constant 0.000000e+00 : f32
    %131 = vector.broadcast %cst_72 : f32 to vector<16x128xf32>
    %132 = arith.minimumf %128, %131 : vector<16x128xf32>
    %133 = math.exp %132 : vector<16x128xf32>
    %cst_73 = arith.constant 1.000000e+00 : f32
    %134 = vector.broadcast %cst_73 : f32 to vector<16x128xf32>
    %135 = arith.subf %133, %134 : vector<16x128xf32>
    %136 = arith.select %130, %128, %135 : vector<16x128xi1>, vector<16x128xf32>
    %c0_74 = arith.constant 0 : index
    %c0_75 = arith.constant 0 : index
    %137 = vector.load %arg20[%c0_74, %c0_75] : memref<128x128xf32, #tpu.memory_space<vmem>>, vector<128x128xf32>
    %cst_76 = arith.constant dense<0.000000e+00> : vector<16x128xf32>
    %138 = tpu.matmul %136, %137, %cst_76 {dimension_numbers = #tpu.dot_dimension_numbers<[1], [0], [0], [1], [0, 0, 1, 1], [], []>} : vector<16x128xf32>, vector<128x128xf32>, vector<16x128xf32> -> vector<16x128xf32>
    %c0_77 = arith.constant 0 : index
    %c0_78 = arith.constant 0 : index
    %139 = vector.load %arg21[%c0_77, %c0_78] : memref<1x128xf32, #tpu.memory_space<vmem>>, vector<1x128xf32>
    %140 = vector.broadcast %139 : vector<1x128xf32> to vector<16x128xf32>
    %141 = arith.addf %138, %140 : vector<16x128xf32>
    %cst_79 = arith.constant 0.000000e+00 : f32
    %142 = vector.broadcast %cst_79 : f32 to vector<16x128xf32>
    %143 = arith.cmpf ogt, %141, %142 : vector<16x128xf32>
    %cst_80 = arith.constant 0.000000e+00 : f32
    %144 = vector.broadcast %cst_80 : f32 to vector<16x128xf32>
    %145 = arith.minimumf %141, %144 : vector<16x128xf32>
    %146 = math.exp %145 : vector<16x128xf32>
    %cst_81 = arith.constant 1.000000e+00 : f32
    %147 = vector.broadcast %cst_81 : f32 to vector<16x128xf32>
    %148 = arith.subf %146, %147 : vector<16x128xf32>
    %149 = arith.select %143, %141, %148 : vector<16x128xi1>, vector<16x128xf32>
    %cst_82 = arith.constant dense<0.000000e+00> : vector<128xf32>
    %150 = vector.multi_reduction <add>, %149, %cst_82 [0] : vector<16x128xf32> to vector<128xf32>
    %151 = vector.shape_cast %150 : vector<128xf32> to vector<1x128xf32>
    %cst_83 = arith.constant 1.600000e+01 : f32
    %152 = vector.broadcast %cst_83 : f32 to vector<1x128xf32>
    %153 = arith.divf %151, %152 : vector<1x128xf32>
    %154 = vector.broadcast %153 : vector<1x128xf32> to vector<16x128xf32>
    %155 = arith.subf %149, %154 : vector<16x128xf32>
    %156 = arith.mulf %155, %155 : vector<16x128xf32>
    %cst_84 = arith.constant dense<0.000000e+00> : vector<128xf32>
    %157 = vector.multi_reduction <add>, %156, %cst_84 [0] : vector<16x128xf32> to vector<128xf32>
    %158 = vector.shape_cast %157 : vector<128xf32> to vector<1x128xf32>
    %cst_85 = arith.constant 1.600000e+01 : f32
    %159 = vector.broadcast %cst_85 : f32 to vector<1x128xf32>
    %160 = arith.divf %158, %159 : vector<1x128xf32>
    %161 = vector.broadcast %153 : vector<1x128xf32> to vector<16x128xf32>
    %162 = arith.subf %149, %161 : vector<16x128xf32>
    %cst_86 = arith.constant 9.99999974E-6 : f32
    %163 = vector.broadcast %cst_86 : f32 to vector<1x128xf32>
    %164 = arith.addf %160, %163 : vector<1x128xf32>
    %165 = math.rsqrt %164 : vector<1x128xf32>
    %166 = vector.broadcast %165 : vector<1x128xf32> to vector<16x128xf32>
    %167 = arith.mulf %162, %166 : vector<16x128xf32>
    %c0_87 = arith.constant 0 : index
    %c0_88 = arith.constant 0 : index
    %168 = vector.load %arg22[%c0_87, %c0_88] : memref<1x128xf32, #tpu.memory_space<vmem>>, vector<1x128xf32>
    %169 = vector.broadcast %168 : vector<1x128xf32> to vector<16x128xf32>
    %170 = arith.mulf %167, %169 : vector<16x128xf32>
    %c0_89 = arith.constant 0 : index
    %c0_90 = arith.constant 0 : index
    %171 = vector.load %arg23[%c0_89, %c0_90] : memref<1x128xf32, #tpu.memory_space<vmem>>, vector<1x128xf32>
    %172 = vector.broadcast %171 : vector<1x128xf32> to vector<16x128xf32>
    %173 = arith.addf %170, %172 : vector<16x128xf32>
    %174 = vector.extract_strided_slice %173 {offsets = [0, 0], sizes = [8, 128], strides = [1, 1]} : vector<16x128xf32> to vector<8x128xf32>
    %cst_91 = arith.constant dense<0.000000e+00> : vector<16x128xf32>
    %175 = tpu.matmul %0, %174, %cst_91 {dimension_numbers = #tpu.dot_dimension_numbers<[1], [0], [0], [1], [0, 0, 1, 1], [], []>} : vector<16x8xf32>, vector<8x128xf32>, vector<16x128xf32> -> vector<16x128xf32>
    %176 = vector.extract_strided_slice %173 {offsets = [8, 0], sizes = [8, 128], strides = [1, 1]} : vector<16x128xf32> to vector<8x128xf32>
    %cst_92 = arith.constant dense<0.000000e+00> : vector<16x128xf32>
    %177 = tpu.matmul %0, %176, %cst_92 {dimension_numbers = #tpu.dot_dimension_numbers<[1], [0], [0], [1], [0, 0, 1, 1], [], []>} : vector<16x8xf32>, vector<8x128xf32>, vector<16x128xf32> -> vector<16x128xf32>
    %178 = tpu.concatenate %175, %177 in 0 : vector<16x128xf32>, vector<16x128xf32> -> vector<32x128xf32>
    %179 = vector.extract_strided_slice %173 {offsets = [0, 0], sizes = [8, 128], strides = [1, 1]} : vector<16x128xf32> to vector<8x128xf32>
    %cst_93 = arith.constant dense<0.000000e+00> : vector<16x128xf32>
    %180 = tpu.matmul %1, %179, %cst_93 {dimension_numbers = #tpu.dot_dimension_numbers<[1], [0], [0], [1], [0, 0, 1, 1], [], []>} : vector<16x8xf32>, vector<8x128xf32>, vector<16x128xf32> -> vector<16x128xf32>
    %181 = vector.extract_strided_slice %173 {offsets = [8, 0], sizes = [8, 128], strides = [1, 1]} : vector<16x128xf32> to vector<8x128xf32>
    %cst_94 = arith.constant dense<0.000000e+00> : vector<16x128xf32>
    %182 = tpu.matmul %1, %181, %cst_94 {dimension_numbers = #tpu.dot_dimension_numbers<[1], [0], [0], [1], [0, 0, 1, 1], [], []>} : vector<16x8xf32>, vector<8x128xf32>, vector<16x128xf32> -> vector<16x128xf32>
    %183 = tpu.concatenate %180, %182 in 0 : vector<16x128xf32>, vector<16x128xf32> -> vector<32x128xf32>
    %c0_95 = arith.constant 0 : index
    %c0_96 = arith.constant 0 : index
    %184 = vector.load %arg27[%c0_95, %c0_96] : memref<1x128xf32, #tpu.memory_space<vmem>>, vector<1x128xf32>
    %c0_97 = arith.constant 0 : index
    %c0_98 = arith.constant 0 : index
    %185 = vector.load %arg24[%c0_97, %c0_98] : memref<128x128xf32, #tpu.memory_space<vmem>>, vector<128x128xf32>
    %cst_99 = arith.constant dense<0.000000e+00> : vector<32x128xf32>
    %186 = tpu.matmul %178, %185, %cst_99 {dimension_numbers = #tpu.dot_dimension_numbers<[1], [0], [0], [1], [0, 0, 1, 1], [], []>} : vector<32x128xf32>, vector<128x128xf32>, vector<32x128xf32> -> vector<32x128xf32>
    %187 = vector.broadcast %184 : vector<1x128xf32> to vector<32x128xf32>
    %188 = arith.addf %187, %186 : vector<32x128xf32>
    %c0_100 = arith.constant 0 : index
    %c0_101 = arith.constant 0 : index
    %189 = vector.load %arg25[%c0_100, %c0_101] : memref<128x128xf32, #tpu.memory_space<vmem>>, vector<128x128xf32>
    %cst_102 = arith.constant dense<0.000000e+00> : vector<32x128xf32>
    %190 = tpu.matmul %183, %189, %cst_102 {dimension_numbers = #tpu.dot_dimension_numbers<[1], [0], [0], [1], [0, 0, 1, 1], [], []>} : vector<32x128xf32>, vector<128x128xf32>, vector<32x128xf32> -> vector<32x128xf32>
    %191 = arith.addf %188, %190 : vector<32x128xf32>
    %c0_103 = arith.constant 0 : index
    %c0_104 = arith.constant 0 : index
    %192 = vector.load %arg26[%c0_103, %c0_104] : memref<128x128xf32, #tpu.memory_space<vmem>>, vector<128x128xf32>
    %cst_105 = arith.constant dense<0.000000e+00> : vector<32x128xf32>
    %193 = tpu.matmul %116, %192, %cst_105 {dimension_numbers = #tpu.dot_dimension_numbers<[1], [0], [0], [1], [0, 0, 1, 1], [], []>} : vector<32x128xf32>, vector<128x128xf32>, vector<32x128xf32> -> vector<32x128xf32>
    %194 = arith.addf %191, %193 : vector<32x128xf32>
    %cst_106 = arith.constant 0.000000e+00 : f32
    %195 = vector.broadcast %cst_106 : f32 to vector<32x128xf32>
    %196 = arith.cmpf ogt, %194, %195 : vector<32x128xf32>
    %cst_107 = arith.constant 0.000000e+00 : f32
    %197 = vector.broadcast %cst_107 : f32 to vector<32x128xf32>
    %198 = arith.minimumf %194, %197 : vector<32x128xf32>
    %199 = math.exp %198 : vector<32x128xf32>
    %cst_108 = arith.constant 1.000000e+00 : f32
    %200 = vector.broadcast %cst_108 : f32 to vector<32x128xf32>
    %201 = arith.subf %199, %200 : vector<32x128xf32>
    %202 = arith.select %196, %194, %201 : vector<32x128xi1>, vector<32x128xf32>
    %c0_109 = arith.constant 0 : index
    %c0_110 = arith.constant 0 : index
    %203 = vector.load %arg28[%c0_109, %c0_110] : memref<128x128xf32, #tpu.memory_space<vmem>>, vector<128x128xf32>
    %cst_111 = arith.constant dense<0.000000e+00> : vector<32x128xf32>
    %204 = tpu.matmul %202, %203, %cst_111 {dimension_numbers = #tpu.dot_dimension_numbers<[1], [0], [0], [1], [0, 0, 1, 1], [], []>} : vector<32x128xf32>, vector<128x128xf32>, vector<32x128xf32> -> vector<32x128xf32>
    %c0_112 = arith.constant 0 : index
    %c0_113 = arith.constant 0 : index
    %205 = vector.load %arg29[%c0_112, %c0_113] : memref<1x128xf32, #tpu.memory_space<vmem>>, vector<1x128xf32>
    %206 = vector.broadcast %205 : vector<1x128xf32> to vector<32x128xf32>
    %207 = arith.addf %204, %206 : vector<32x128xf32>
    %cst_114 = arith.constant 0.000000e+00 : f32
    %208 = vector.broadcast %cst_114 : f32 to vector<32x128xf32>
    %209 = arith.cmpf ogt, %207, %208 : vector<32x128xf32>
    %cst_115 = arith.constant 0.000000e+00 : f32
    %210 = vector.broadcast %cst_115 : f32 to vector<32x128xf32>
    %211 = arith.minimumf %207, %210 : vector<32x128xf32>
    %212 = math.exp %211 : vector<32x128xf32>
    %cst_116 = arith.constant 1.000000e+00 : f32
    %213 = vector.broadcast %cst_116 : f32 to vector<32x128xf32>
    %214 = arith.subf %212, %213 : vector<32x128xf32>
    %215 = arith.select %209, %207, %214 : vector<32x128xi1>, vector<32x128xf32>
    %cst_117 = arith.constant dense<0.000000e+00> : vector<128xf32>
    %216 = vector.multi_reduction <add>, %215, %cst_117 [0] : vector<32x128xf32> to vector<128xf32>
    %217 = vector.shape_cast %216 : vector<128xf32> to vector<1x128xf32>
    %cst_118 = arith.constant 3.200000e+01 : f32
    %218 = vector.broadcast %cst_118 : f32 to vector<1x128xf32>
    %219 = arith.divf %217, %218 : vector<1x128xf32>
    %220 = vector.broadcast %219 : vector<1x128xf32> to vector<32x128xf32>
    %221 = arith.subf %215, %220 : vector<32x128xf32>
    %222 = arith.mulf %221, %221 : vector<32x128xf32>
    %cst_119 = arith.constant dense<0.000000e+00> : vector<128xf32>
    %223 = vector.multi_reduction <add>, %222, %cst_119 [0] : vector<32x128xf32> to vector<128xf32>
    %224 = vector.shape_cast %223 : vector<128xf32> to vector<1x128xf32>
    %cst_120 = arith.constant 3.200000e+01 : f32
    %225 = vector.broadcast %cst_120 : f32 to vector<1x128xf32>
    %226 = arith.divf %224, %225 : vector<1x128xf32>
    %227 = vector.broadcast %219 : vector<1x128xf32> to vector<32x128xf32>
    %228 = arith.subf %215, %227 : vector<32x128xf32>
    %cst_121 = arith.constant 9.99999974E-6 : f32
    %229 = vector.broadcast %cst_121 : f32 to vector<1x128xf32>
    %230 = arith.addf %226, %229 : vector<1x128xf32>
    %231 = math.rsqrt %230 : vector<1x128xf32>
    %232 = vector.broadcast %231 : vector<1x128xf32> to vector<32x128xf32>
    %233 = arith.mulf %228, %232 : vector<32x128xf32>
    %c0_122 = arith.constant 0 : index
    %c0_123 = arith.constant 0 : index
    %234 = vector.load %arg30[%c0_122, %c0_123] : memref<1x128xf32, #tpu.memory_space<vmem>>, vector<1x128xf32>
    %235 = vector.broadcast %234 : vector<1x128xf32> to vector<32x128xf32>
    %236 = arith.mulf %233, %235 : vector<32x128xf32>
    %c0_124 = arith.constant 0 : index
    %c0_125 = arith.constant 0 : index
    %237 = vector.load %arg31[%c0_124, %c0_125] : memref<1x128xf32, #tpu.memory_space<vmem>>, vector<1x128xf32>
    %238 = vector.broadcast %237 : vector<1x128xf32> to vector<32x128xf32>
    %239 = arith.addf %236, %238 : vector<32x128xf32>
    %c0_126 = arith.constant 0 : index
    %c0_127 = arith.constant 0 : index
    %240 = vector.load %arg32[%c0_126, %c0_127] : memref<128x128xf32, #tpu.memory_space<vmem>>, vector<128x128xf32>
    %cst_128 = arith.constant dense<0.000000e+00> : vector<32x128xf32>
    %241 = tpu.matmul %239, %240, %cst_128 {dimension_numbers = #tpu.dot_dimension_numbers<[1], [0], [0], [1], [0, 0, 1, 1], [], []>} : vector<32x128xf32>, vector<128x128xf32>, vector<32x128xf32> -> vector<32x128xf32>
    %c0_129 = arith.constant 0 : index
    %c0_130 = arith.constant 0 : index
    %242 = vector.load %arg33[%c0_129, %c0_130] : memref<1x128xf32, #tpu.memory_space<vmem>>, vector<1x128xf32>
    %243 = vector.broadcast %242 : vector<1x128xf32> to vector<32x128xf32>
    %244 = arith.addf %241, %243 : vector<32x128xf32>
    %c0_131 = arith.constant 0 : index
    %c0_132 = arith.constant 0 : index
    %245 = vector.load %arg34[%c0_131, %c0_132] : memref<32x128xf32, #tpu.memory_space<vmem>>, vector<32x128xf32>
    tpu.vector_store %arg34[%c0_131, %c0_132], %244 {strides = array<i32>} : memref<32x128xf32, #tpu.memory_space<vmem>>, vector<32x128xf32>,
    return
  }
  func.func @transform_0(%arg0: i32) -> (i32, i32) {
    %c0_i32 = arith.constant 0 : i32
    %c0_i32_0 = arith.constant 0 : i32
    %c0_i32_1 = arith.constant 0 : i32
    return %c0_i32, %c0_i32_0 : i32, i32
  }
  func.func @transform_1(%arg0: i32) -> (i32, i32) {
    %c0_i32 = arith.constant 0 : i32
    %c0_i32_0 = arith.constant 0 : i32
    %c0_i32_1 = arith.constant 0 : i32
    return %c0_i32, %c0_i32_0 : i32, i32
  }
  func.func @transform_2(%arg0: i32) -> (i32, i32) {
    %c0_i32 = arith.constant 0 : i32
    %c0_i32_0 = arith.constant 0 : i32
    %c0_i32_1 = arith.constant 0 : i32
    return %c0_i32, %c0_i32_0 : i32, i32
  }
  func.func @transform_3(%arg0: i32) -> (i32, i32) {
    %c0_i32 = arith.constant 0 : i32
    %c0_i32_0 = arith.constant 0 : i32
    %c0_i32_1 = arith.constant 0 : i32
    return %c0_i32, %c0_i32_0 : i32, i32
  }
  func.func @transform_4(%arg0: i32) -> (i32, i32) {
    %c0_i32 = arith.constant 0 : i32
    %c0_i32_0 = arith.constant 0 : i32
    %c0_i32_1 = arith.constant 0 : i32
    return %c0_i32, %c0_i32_0 : i32, i32
  }
  func.func @transform_5(%arg0: i32) -> (i32, i32) {
    %c0_i32 = arith.constant 0 : i32
    %c0_i32_0 = arith.constant 0 : i32
    %c0_i32_1 = arith.constant 0 : i32
    return %c0_i32, %c0_i32_0 : i32, i32
  }
  func.func @transform_6(%arg0: i32) -> (i32, i32) {
    %c0_i32 = arith.constant 0 : i32
    %c0_i32_0 = arith.constant 0 : i32
    %c0_i32_1 = arith.constant 0 : i32
    return %c0_i32, %c0_i32_0 : i32, i32
  }
  func.func @transform_7(%arg0: i32) -> (i32, i32) {
    %c0_i32 = arith.constant 0 : i32
    %c0_i32_0 = arith.constant 0 : i32
    %c0_i32_1 = arith.constant 0 : i32
    return %c0_i32, %c0_i32_0 : i32, i32
  }
  func.func @transform_8(%arg0: i32) -> (i32, i32) {
    %c0_i32 = arith.constant 0 : i32
    %c0_i32_0 = arith.constant 0 : i32
    %c0_i32_1 = arith.constant 0 : i32
    return %c0_i32, %c0_i32_0 : i32, i32
  }
  func.func @transform_9(%arg0: i32) -> (i32, i32) {
    %c0_i32 = arith.constant 0 : i32
    %c0_i32_0 = arith.constant 0 : i32
    %c0_i32_1 = arith.constant 0 : i32
    return %c0_i32, %c0_i32_0 : i32, i32
  }
  func.func @transform_10(%arg0: i32) -> (i32, i32) {
    %c0_i32 = arith.constant 0 : i32
    %c0_i32_0 = arith.constant 0 : i32
    %c0_i32_1 = arith.constant 0 : i32
    return %c0_i32, %c0_i32_0 : i32, i32
  }
  func.func @transform_11(%arg0: i32) -> (i32, i32) {
    %c0_i32 = arith.constant 0 : i32
    %c0_i32_0 = arith.constant 0 : i32
    %c0_i32_1 = arith.constant 0 : i32
    return %c0_i32, %c0_i32_0 : i32, i32
  }
  func.func @transform_12(%arg0: i32) -> (i32, i32) {
    %c0_i32 = arith.constant 0 : i32
    %c0_i32_0 = arith.constant 0 : i32
    %c0_i32_1 = arith.constant 0 : i32
    return %c0_i32, %c0_i32_0 : i32, i32
  }
  func.func @transform_13(%arg0: i32) -> (i32, i32) {
    %c0_i32 = arith.constant 0 : i32
    %c0_i32_0 = arith.constant 0 : i32
    %c0_i32_1 = arith.constant 0 : i32
    return %c0_i32, %c0_i32_0 : i32, i32
  }
  func.func @transform_14(%arg0: i32) -> (i32, i32) {
    %c0_i32 = arith.constant 0 : i32
    %c0_i32_0 = arith.constant 0 : i32
    %c0_i32_1 = arith.constant 0 : i32
    return %c0_i32, %c0_i32_0 : i32, i32
  }
  func.func @transform_15(%arg0: i32) -> (i32, i32) {
    %c0_i32 = arith.constant 0 : i32
    %c0_i32_0 = arith.constant 0 : i32
    %c0_i32_1 = arith.constant 0 : i32
    return %c0_i32, %c0_i32_0 : i32, i32
  }
  func.func @transform_16(%arg0: i32) -> (i32, i32) {
    %c0_i32 = arith.constant 0 : i32
    %c0_i32_0 = arith.constant 0 : i32
    %c0_i32_1 = arith.constant 0 : i32
    return %c0_i32, %c0_i32_0 : i32, i32
  }
  func.func @transform_17(%arg0: i32) -> (i32, i32) {
    %c0_i32 = arith.constant 0 : i32
    %c0_i32_0 = arith.constant 0 : i32
    %c0_i32_1 = arith.constant 0 : i32
    return %c0_i32, %c0_i32_0 : i32, i32
  }
  func.func @transform_18(%arg0: i32) -> (i32, i32) {
    %c0_i32 = arith.constant 0 : i32
    %c0_i32_0 = arith.constant 0 : i32
    %c0_i32_1 = arith.constant 0 : i32
    return %c0_i32, %c0_i32_0 : i32, i32
  }
  func.func @transform_19(%arg0: i32) -> (i32, i32) {
    %c0_i32 = arith.constant 0 : i32
    %c0_i32_0 = arith.constant 0 : i32
    %c0_i32_1 = arith.constant 0 : i32
    return %c0_i32, %c0_i32_0 : i32, i32
  }
  func.func @transform_20(%arg0: i32) -> (i32, i32) {
    %c0_i32 = arith.constant 0 : i32
    %c0_i32_0 = arith.constant 0 : i32
    %c0_i32_1 = arith.constant 0 : i32
    return %c0_i32, %c0_i32_0 : i32, i32
  }
  func.func @transform_21(%arg0: i32) -> (i32, i32) {
    %c0_i32 = arith.constant 0 : i32
    %c0_i32_0 = arith.constant 0 : i32
    %c0_i32_1 = arith.constant 0 : i32
    return %c0_i32, %c0_i32_0 : i32, i32
  }
  func.func @transform_22(%arg0: i32) -> (i32, i32) {
    %c0_i32 = arith.constant 0 : i32
    %c0_i32_0 = arith.constant 0 : i32
    %c0_i32_1 = arith.constant 0 : i32
    return %c0_i32, %c0_i32_0 : i32, i32
  }
  func.func @transform_23(%arg0: i32) -> (i32, i32) {
    %c0_i32 = arith.constant 0 : i32
    %c0_i32_0 = arith.constant 0 : i32
    %c0_i32_1 = arith.constant 0 : i32
    return %c0_i32, %c0_i32_0 : i32, i32
  }
  func.func @transform_24(%arg0: i32) -> (i32, i32) {
    %c0_i32 = arith.constant 0 : i32
    %c0_i32_0 = arith.constant 0 : i32
    %c0_i32_1 = arith.constant 0 : i32
    return %c0_i32, %c0_i32_0 : i32, i32
  }
  func.func @transform_25(%arg0: i32) -> (i32, i32) {
    %c0_i32 = arith.constant 0 : i32
    %c0_i32_0 = arith.constant 0 : i32
    %c0_i32_1 = arith.constant 0 : i32
    return %c0_i32, %c0_i32_0 : i32, i32
  }
  func.func @transform_26(%arg0: i32) -> (i32, i32) {
    %c0_i32 = arith.constant 0 : i32
    %c0_i32_0 = arith.constant 0 : i32
    %c0_i32_1 = arith.constant 0 : i32
    return %c0_i32, %c0_i32_0 : i32, i32
  }
  func.func @transform_27(%arg0: i32) -> (i32, i32) {
    %c0_i32 = arith.constant 0 : i32
    %c0_i32_0 = arith.constant 0 : i32
    %c0_i32_1 = arith.constant 0 : i32
    return %c0_i32, %c0_i32_0 : i32, i32
  }
  func.func @transform_28(%arg0: i32) -> (i32, i32) {
    %c0_i32 = arith.constant 0 : i32
    %c0_i32_0 = arith.constant 0 : i32
    %c0_i32_1 = arith.constant 0 : i32
    return %c0_i32, %c0_i32_0 : i32, i32
  }
  func.func @transform_29(%arg0: i32) -> (i32, i32) {
    %c0_i32 = arith.constant 0 : i32
    %c0_i32_0 = arith.constant 0 : i32
    %c0_i32_1 = arith.constant 0 : i32
    return %c0_i32, %c0_i32_0 : i32, i32
  }
  func.func @transform_30(%arg0: i32) -> (i32, i32) {
    %c0_i32 = arith.constant 0 : i32
    %c0_i32_0 = arith.constant 0 : i32
    %c0_i32_1 = arith.constant 0 : i32
    return %c0_i32, %c0_i32_0 : i32, i32
  }
  func.func @transform_31(%arg0: i32) -> (i32, i32) {
    %c0_i32 = arith.constant 0 : i32
    %c0_i32_0 = arith.constant 0 : i32
    %c0_i32_1 = arith.constant 0 : i32
    return %c0_i32, %c0_i32_0 : i32, i32
  }
  func.func @transform_32(%arg0: i32) -> (i32, i32) {
    %c0_i32 = arith.constant 0 : i32
    %c0_i32_0 = arith.constant 0 : i32
    %c0_i32_1 = arith.constant 0 : i32
    return %c0_i32, %c0_i32_0 : i32, i32
  }
  func.func @transform_33(%arg0: i32) -> (i32, i32) {
    %c0_i32 = arith.constant 0 : i32
    %c0_i32_0 = arith.constant 0 : i32
    %c0_i32_1 = arith.constant 0 : i32
    return %c0_i32, %c0_i32_0 : i32, i32
  }
}

</mosaic_0001>

<llo_original>
// kernel: tpu_custom_call.1
$region0: #{tpu_custom_call.1}
  #allocation0 [shape = 'u32[]', space=smem, size = 0x4, offset = 0x4, fixed_abs, tag = 'smem constant byte address 0x4 - core index']
  #allocation1 [shape = 'u32[72,128]{1,0:T(1,128)}', space=vmem, size = 0x9000, scoped, tag = 'internal scratch']
  %s0 = inlined_call_operand.smem [shape: u32[34], index: -1, kind: input, shape index: {}]
  %s1 = sld [smem:[%s0]]
  %s2 = scalar_lea.smem %s0, 1
  %s3 = sld [smem:[%s2]]
  %s4 = scalar_lea.smem %s0, 2
  %s5 = sld [smem:[%s4]]
  %s6 = scalar_lea.smem %s0, 3
  %s7 = sld [smem:[%s6]]
  %s8 = scalar_lea.smem %s0, 4
  %s9 = sld [smem:[%s8]]
  %s10 = scalar_lea.smem %s0, 5
  %s11 = sld [smem:[%s10]]
  %s12 = scalar_lea.smem %s0, 6
  %s13 = sld [smem:[%s12]]
  %s14 = scalar_lea.smem %s0, 7
  %s15 = sld [smem:[%s14]]
  %s16 = scalar_lea.smem %s0, 8
  %s17 = sld [smem:[%s16]]
  %s18 = scalar_lea.smem %s0, 9
  %s19 = sld [smem:[%s18]]
  %s20 = scalar_lea.smem %s0, 10
  %s21 = sld [smem:[%s20]]
  %s22 = scalar_lea.smem %s0, 11
  %s23 = sld [smem:[%s22]]
  %s24 = scalar_lea.smem %s0, 12
  %s25 = sld [smem:[%s24]]
  %s26 = scalar_lea.smem %s0, 13
  %s27 = sld [smem:[%s26]]
  %s28 = scalar_lea.smem %s0, 14
  %s29 = sld [smem:[%s28]]
  %s30 = scalar_lea.smem %s0, 15
  %s31 = sld [smem:[%s30]]
  %s32 = scalar_lea.smem %s0, 16
  %s33 = sld [smem:[%s32]]
  %s34 = scalar_lea.smem %s0, 17
  %s35 = sld [smem:[%s34]]
  %s36 = scalar_lea.smem %s0, 18
  %s37 = sld [smem:[%s36]]
  %s38 = scalar_lea.smem %s0, 19
  %s39 = sld [smem:[%s38]]
  %s40 = scalar_lea.smem %s0, 20
  %s41 = sld [smem:[%s40]]
  %s42 = scalar_lea.smem %s0, 21
  %s43 = sld [smem:[%s42]]
  %s44 = scalar_lea.smem %s0, 22
  %s45 = sld [smem:[%s44]]
  %s46 = scalar_lea.smem %s0, 23
  %s47 = sld [smem:[%s46]]
  %s48 = scalar_lea.smem %s0, 24
  %s49 = sld [smem:[%s48]]
  %s50 = scalar_lea.smem %s0, 25
  %s51 = sld [smem:[%s50]]
  %s52 = scalar_lea.smem %s0, 26
  %s53 = sld [smem:[%s52]]
  %s54 = scalar_lea.smem %s0, 27
  %s55 = sld [smem:[%s54]]
  %s56 = scalar_lea.smem %s0, 28
  %s57 = sld [smem:[%s56]]
  %s58 = scalar_lea.smem %s0, 29
  %s59 = sld [smem:[%s58]]
  %s60 = scalar_lea.smem %s0, 30
  %s61 = sld [smem:[%s60]]
  %s62 = scalar_lea.smem %s0, 31
  %s63 = sld [smem:[%s62]]
  %s64 = scalar_lea.smem %s0, 32
  %s65 = sld [smem:[%s64]]
  %s66 = scalar_lea.smem %s0, 33
  %s67 = sld [smem:[%s66]]
  %s68 = sld [smem:[#allocation0]]
  $region186: #{tpu_custom_call.1} parent=0
    _
  %s70 = ssub.s32 1, %s68
  %s71 = scalar_select 0, %s70, %s68
  $region1: #{tpu_custom_call.1} parent=0
    #allocation2 [shape = 'u8[65536]{0}', space=vmem, size = 0x10000, scoped, tag = 'input window, operand 6, single buffered']
    #allocation3 [shape = 's32[1]{0}', space=sflag, size = 0x4, scoped, tag = 'scoped memory for tpu_custom_call.1']
    #allocation4 [shape = 's32[1]{0}', space=sflag, size = 0x4, scoped, tag = 'scoped memory for tpu_custom_call.1']
    #allocation5 [shape = 'u8[65536]{0}', space=vmem, size = 0x10000, scoped, tag = 'input window, operand 10, single buffered']
    #allocation6 [shape = 's32[1]{0}', space=sflag, size = 0x4, scoped, tag = 'scoped memory for tpu_custom_call.1']
    #allocation7 [shape = 'u8[65536]{0}', space=vmem, size = 0x10000, scoped, tag = 'input window, operand 11, single buffered']
    #allocation8 [shape = 'u8[65536]{0}', space=vmem, size = 0x10000, scoped, tag = 'input window, operand 13, single buffered']
    #allocation9 [shape = 's32[1]{0}', space=sflag, size = 0x4, scoped, tag = 'scoped memory for tpu_custom_call.1']
    #allocation10 [shape = 'u8[65536]{0}', space=vmem, size = 0x10000, scoped, tag = 'input window, operand 17, single buffered']
    #allocation11 [shape = 'u8[65536]{0}', space=vmem, size = 0x10000, scoped, tag = 'input window, operand 19, single buffered']
    #allocation12 [shape = 's32[1]{0}', space=sflag, size = 0x4, scoped, tag = 'scoped memory for tpu_custom_call.1']
    #allocation13 [shape = 'u8[65536]{0}', space=vmem, size = 0x10000, scoped, tag = 'input window, operand 23, single buffered']
    #allocation14 [shape = 'u8[65536]{0}', space=vmem, size = 0x10000, scoped, tag = 'input window, operand 24, single buffered']
    #allocation15 [shape = 's32[1]{0}', space=sflag, size = 0x4, scoped, tag = 'scoped memory for tpu_custom_call.1']
    #allocation16 [shape = 'u8[65536]{0}', space=vmem, size = 0x10000, scoped, tag = 'input window, operand 25, single buffered']
    #allocation17 [shape = 'u8[65536]{0}', space=vmem, size = 0x10000, scoped, tag = 'input window, operand 27, single buffered']
    #allocation18 [shape = 's32[1]{0}', space=sflag, size = 0x4, scoped, tag = 'scoped memory for tpu_custom_call.1']
    #allocation19 [shape = 'u8[65536]{0}', space=vmem, size = 0x10000, scoped, tag = 'input window, operand 31, single buffered']
    #allocation20 [shape = 'u8[16384]{0}', space=vmem, size = 0x4000, scoped, tag = 'output window, operand 0, single buffered']
    %72 = vsyncpa [#allocation3], 0
    %73 = vsyncpa [#allocation6], 0
    %74 = vsyncpa [#allocation9], 0
    %75 = vsyncpa [#allocation12], 0
    %76 = vsyncpa [#allocation15], 0
    %77 = vsyncpa [#allocation18], 0
    %78 = vsyncpa [#allocation4], 0
    // Predicated region
    $region2: #{tpu_custom_call.1} parent=1 // pred_check
      _
    $region3: #{tpu_custom_call.1} parent=1 // pred_check_branch
      %80 = sbr.rel (0) target = $region5
    $region4: #{tpu_custom_call.1} parent=1 // pred_region
      _
    $region5: #{tpu_custom_call.1} parent=1 // pred_fallthru
      _
    // Predicated region
    $region6: #{tpu_custom_call.1} parent=1 // pred_check
      _
    $region7: #{tpu_custom_call.1} parent=1 // pred_check_branch
      %82 = sbr.rel (0) target = $region9
    $region8: #{tpu_custom_call.1} parent=1 // pred_region
      _
    $region9: #{tpu_custom_call.1} parent=1 // pred_fallthru
      _
    // Predicated region
    $region10: #{tpu_custom_call.1} parent=1 // pred_check
      _
    $region11: #{tpu_custom_call.1} parent=1 // pred_check_branch
      %84 = sbr.rel (0) target = $region13
    $region12: #{tpu_custom_call.1} parent=1 // pred_region
      _
    $region13: #{tpu_custom_call.1} parent=1 // pred_fallthru
      _
    // Predicated region
    $region14: #{tpu_custom_call.1} parent=1 // pred_check
      _
    $region15: #{tpu_custom_call.1} parent=1 // pred_check_branch
      %86 = sbr.rel (0) target = $region17
    $region16: #{tpu_custom_call.1} parent=1 // pred_region
      _
    $region17: #{tpu_custom_call.1} parent=1 // pred_fallthru
      _
    // Predicated region
    $region18: #{tpu_custom_call.1} parent=1 // pred_check
      _
    $region19: #{tpu_custom_call.1} parent=1 // pred_check_branch
      %88 = sbr.rel (0) target = $region21
    $region20: #{tpu_custom_call.1} parent=1 // pred_region
      _
    $region21: #{tpu_custom_call.1} parent=1 // pred_fallthru
      _
    // Predicated region
    $region22: #{tpu_custom_call.1} parent=1 // pred_check
      _
    $region23: #{tpu_custom_call.1} parent=1 // pred_check_branch
      %90 = sbr.rel (0) target = $region25
    $region24: #{tpu_custom_call.1} parent=1 // pred_region
      _
    $region25: #{tpu_custom_call.1} parent=1 // pred_fallthru
      _
    // Predicated region
    $region26: #{tpu_custom_call.1} parent=1 // pred_check
      _
    $region27: #{tpu_custom_call.1} parent=1 // pred_check_branch
      %92 = sbr.rel (0) target = $region29
    $region28: #{tpu_custom_call.1} parent=1 // pred_region
      %94 = vsyncadd [#allocation3], 0
      %s95 = sshll.u32 %s13, 4
      %s96 = int_to_ptr.hbm [resolvable:$true] %s95
      %s97 = sshll.u32 [#allocation2], 4
      %s98 = int_to_ptr.vmem [resolvable:$true] %s97
      %103 = dma.hbm_to_vmem [thread:$0]  %s96, 2048, %s98, [#allocation3], 128, 128, 8
    $region29: #{tpu_custom_call.1} parent=1 // pred_fallthru
      _
    // Predicated region
    $region30: #{tpu_custom_call.1} parent=1 // pred_check
      _
    $region31: #{tpu_custom_call.1} parent=1 // pred_check_branch
      %105 = sbr.rel (0) target = $region33
    $region32: #{tpu_custom_call.1} parent=1 // pred_region
      _
    $region33: #{tpu_custom_call.1} parent=1 // pred_fallthru
      _
    // Predicated region
    $region34: #{tpu_custom_call.1} parent=1 // pred_check
      _
    $region35: #{tpu_custom_call.1} parent=1 // pred_check_branch
      %107 = sbr.rel (0) target = $region37
    $region36: #{tpu_custom_call.1} parent=1 // pred_region
      _
    $region37: #{tpu_custom_call.1} parent=1 // pred_fallthru
      _
    // Predicated region
    $region38: #{tpu_custom_call.1} parent=1 // pred_check
      _
    $region39: #{tpu_custom_call.1} parent=1 // pred_check_branch
      %109 = sbr.rel (0) target = $region41
    $region40: #{tpu_custom_call.1} parent=1 // pred_region
      _
    $region41: #{tpu_custom_call.1} parent=1 // pred_fallthru
      _
    // Predicated region
    $region42: #{tpu_custom_call.1} parent=1 // pred_check
      _
    $region43: #{tpu_custom_call.1} parent=1 // pred_check_branch
      %111 = sbr.rel (0) target = $region45
    $region44: #{tpu_custom_call.1} parent=1 // pred_region
      %113 = vsyncadd [#allocation6], 0
      %s114 = sshll.u32 %s21, 4
      %s115 = int_to_ptr.hbm [resolvable:$true] %s114
      %s116 = sshll.u32 [#allocation5], 4
      %s117 = int_to_ptr.vmem [resolvable:$true] %s116
      %122 = dma.hbm_to_vmem [thread:$0]  %s115, 2048, %s117, [#allocation6], 128, 128, 8
    $region45: #{tpu_custom_call.1} parent=1 // pred_fallthru
      _
    // Predicated region
    $region46: #{tpu_custom_call.1} parent=1 // pred_check
      _
    $region47: #{tpu_custom_call.1} parent=1 // pred_check_branch
      %124 = sbr.rel (0) target = $region49
    $region48: #{tpu_custom_call.1} parent=1 // pred_region
      %126 = vsyncadd [#allocation6], 0
      %s127 = sshll.u32 %s23, 4
      %s128 = int_to_ptr.hbm [resolvable:$true] %s127
      %s129 = sshll.u32 [#allocation7], 4
      %s130 = int_to_ptr.vmem [resolvable:$true] %s129
      %135 = dma.hbm_to_vmem [thread:$0]  %s128, 2048, %s130, [#allocation6], 128, 128, 8
    $region49: #{tpu_custom_call.1} parent=1 // pred_fallthru
      _
    // Predicated region
    $region50: #{tpu_custom_call.1} parent=1 // pred_check
      _
    $region51: #{tpu_custom_call.1} parent=1 // pred_check_branch
      %137 = sbr.rel (0) target = $region53
    $region52: #{tpu_custom_call.1} parent=1 // pred_region
      _
    $region53: #{tpu_custom_call.1} parent=1 // pred_fallthru
      _
    // Predicated region
    $region54: #{tpu_custom_call.1} parent=1 // pred_check
      _
    $region55: #{tpu_custom_call.1} parent=1 // pred_check_branch
      %139 = sbr.rel (0) target = $region57
    $region56: #{tpu_custom_call.1} parent=1 // pred_region
      %141 = vsyncadd [#allocation9], 0
      %s142 = sshll.u32 %s27, 4
      %s143 = int_to_ptr.hbm [resolvable:$true] %s142
      %s144 = sshll.u32 [#allocation8], 4
      %s145 = int_to_ptr.vmem [resolvable:$true] %s144
      %150 = dma.hbm_to_vmem [thread:$0]  %s143, 2048, %s145, [#allocation9], 128, 128, 8
    $region57: #{tpu_custom_call.1} parent=1 // pred_fallthru
      _
    // Predicated region
    $region58: #{tpu_custom_call.1} parent=1 // pred_check
      _
    $region59: #{tpu_custom_call.1} parent=1 // pred_check_branch
      %152 = sbr.rel (0) target = $region61
    $region60: #{tpu_custom_call.1} parent=1 // pred_region
      _
    $region61: #{tpu_custom_call.1} parent=1 // pred_fallthru
      _
    // Predicated region
    $region62: #{tpu_custom_call.1} parent=1 // pred_check
      _
    $region63: #{tpu_custom_call.1} parent=1 // pred_check_branch
      %154 = sbr.rel (0) target = $region65
    $region64: #{tpu_custom_call.1} parent=1 // pred_region
      _
    $region65: #{tpu_custom_call.1} parent=1 // pred_fallthru
      _
    // Predicated region
    $region66: #{tpu_custom_call.1} parent=1 // pred_check
      _
    $region67: #{tpu_custom_call.1} parent=1 // pred_check_branch
      %156 = sbr.rel (0) target = $region69
    $region68: #{tpu_custom_call.1} parent=1 // pred_region
      _
    $region69: #{tpu_custom_call.1} parent=1 // pred_fallthru
      _
    // Predicated region
    $region70: #{tpu_custom_call.1} parent=1 // pred_check
      _
    $region71: #{tpu_custom_call.1} parent=1 // pred_check_branch
      %158 = sbr.rel (0) target = $region73
    $region72: #{tpu_custom_call.1} parent=1 // pred_region
      %160 = vsyncadd [#allocation9], 0
      %s161 = sshll.u32 %s35, 4
      %s162 = int_to_ptr.hbm [resolvable:$true] %s161
      %s163 = sshll.u32 [#allocation10], 4
      %s164 = int_to_ptr.vmem [resolvable:$true] %s163
      %169 = dma.hbm_to_vmem [thread:$0]  %s162, 2048, %s164, [#allocation9], 128, 128, 8
    $region73: #{tpu_custom_call.1} parent=1 // pred_fallthru
      _
    // Predicated region
    $region74: #{tpu_custom_call.1} parent=1 // pred_check
      _
    $region75: #{tpu_custom_call.1} parent=1 // pred_check_branch
      %171 = sbr.rel (0) target = $region77
    $region76: #{tpu_custom_call.1} parent=1 // pred_region
      _
    $region77: #{tpu_custom_call.1} parent=1 // pred_fallthru
      _
    // Predicated region
    $region78: #{tpu_custom_call.1} parent=1 // pred_check
      _
    $region79: #{tpu_custom_call.1} parent=1 // pred_check_branch
      %173 = sbr.rel (0) target = $region81
    $region80: #{tpu_custom_call.1} parent=1 // pred_region
      %175 = vsyncadd [#allocation12], 0
      %s176 = sshll.u32 %s39, 4
      %s177 = int_to_ptr.hbm [resolvable:$true] %s176
      %s178 = sshll.u32 [#allocation11], 4
      %s179 = int_to_ptr.vmem [resolvable:$true] %s178
      %184 = dma.hbm_to_vmem [thread:$0]  %s177, 2048, %s179, [#allocation12], 128, 128, 8
    $region81: #{tpu_custom_call.1} parent=1 // pred_fallthru
      _
    // Predicated region
    $region82: #{tpu_custom_call.1} parent=1 // pred_check
      _
    $region83: #{tpu_custom_call.1} parent=1 // pred_check_branch
      %186 = sbr.rel (0) target = $region85
    $region84: #{tpu_custom_call.1} parent=1 // pred_region
      _
    $region85: #{tpu_custom_call.1} parent=1 // pred_fallthru
      _
    // Predicated region
    $region86: #{tpu_custom_call.1} parent=1 // pred_check
      _
    $region87: #{tpu_custom_call.1} parent=1 // pred_check_branch
      %188 = sbr.rel (0) target = $region89
    $region88: #{tpu_custom_call.1} parent=1 // pred_region
      _
    $region89: #{tpu_custom_call.1} parent=1 // pred_fallthru
      _
    // Predicated region
    $region90: #{tpu_custom_call.1} parent=1 // pred_check
      _
    $region91: #{tpu_custom_call.1} parent=1 // pred_check_branch
      %190 = sbr.rel (0) target = $region93
    $region92: #{tpu_custom_call.1} parent=1 // pred_region
      _
    $region93: #{tpu_custom_call.1} parent=1 // pred_fallthru
      _
    // Predicated region
    $region94: #{tpu_custom_call.1} parent=1 // pred_check
      _
    $region95: #{tpu_custom_call.1} parent=1 // pred_check_branch
      %192 = sbr.rel (0) target = $region97
    $region96: #{tpu_custom_call.1} parent=1 // pred_region
      %194 = vsyncadd [#allocation12], 0
      %s195 = sshll.u32 %s47, 4
      %s196 = int_to_ptr.hbm [resolvable:$true] %s195
      %s197 = sshll.u32 [#allocation13], 4
      %s198 = int_to_ptr.vmem [resolvable:$true] %s197
      %203 = dma.hbm_to_vmem [thread:$0]  %s196, 2048, %s198, [#allocation12], 128, 128, 8
    $region97: #{tpu_custom_call.1} parent=1 // pred_fallthru
      _
    // Predicated region
    $region98: #{tpu_custom_call.1} parent=1 // pred_check
      _
    $region99: #{tpu_custom_call.1} parent=1 // pred_check_branch
      %205 = sbr.rel (0) target = $region101
    $region100: #{tpu_custom_call.1} parent=1 // pred_region
      %207 = vsyncadd [#allocation15], 0
      %s208 = sshll.u32 %s49, 4
      %s209 = int_to_ptr.hbm [resolvable:$true] %s208
      %s210 = sshll.u32 [#allocation14], 4
      %s211 = int_to_ptr.vmem [resolvable:$true] %s210
      %216 = dma.hbm_to_vmem [thread:$0]  %s209, 2048, %s211, [#allocation15], 128, 128, 8
    $region101: #{tpu_custom_call.1} parent=1 // pred_fallthru
      _
    // Predicated region
    $region102: #{tpu_custom_call.1} parent=1 // pred_check
      _
    $region103: #{tpu_custom_call.1} parent=1 // pred_check_branch
      %218 = sbr.rel (0) target = $region105
    $region104: #{tpu_custom_call.1} parent=1 // pred_region
      %220 = vsyncadd [#allocation15], 0
      %s221 = sshll.u32 %s51, 4
      %s222 = int_to_ptr.hbm [resolvable:$true] %s221
      %s223 = sshll.u32 [#allocation16], 4
      %s224 = int_to_ptr.vmem [resolvable:$true] %s223
      %229 = dma.hbm_to_vmem [thread:$0]  %s222, 2048, %s224, [#allocation15], 128, 128, 8
    $region105: #{tpu_custom_call.1} parent=1 // pred_fallthru
      _
    // Predicated region
    $region106: #{tpu_custom_call.1} parent=1 // pred_check
      _
    $region107: #{tpu_custom_call.1} parent=1 // pred_check_branch
      %231 = sbr.rel (0) target = $region109
    $region108: #{tpu_custom_call.1} parent=1 // pred_region
      _
    $region109: #{tpu_custom_call.1} parent=1 // pred_fallthru
      _
    // Predicated region
    $region110: #{tpu_custom_call.1} parent=1 // pred_check
      _
    $region111: #{tpu_custom_call.1} parent=1 // pred_check_branch
      %233 = sbr.rel (0) target = $region113
    $region112: #{tpu_custom_call.1} parent=1 // pred_region
      %235 = vsyncadd [#allocation18], 0
      %s236 = sshll.u32 %s55, 4
      %s237 = int_to_ptr.hbm [resolvable:$true] %s236
      %s238 = sshll.u32 [#allocation17], 4
      %s239 = int_to_ptr.vmem [resolvable:$true] %s238
      %244 = dma.hbm_to_vmem [thread:$0]  %s237, 2048, %s239, [#allocation18], 128, 128, 8
    $region113: #{tpu_custom_call.1} parent=1 // pred_fallthru
      _
    // Predicated region
    $region114: #{tpu_custom_call.1} parent=1 // pred_check
      _
    $region115: #{tpu_custom_call.1} parent=1 // pred_check_branch
      %246 = sbr.rel (0) target = $region117
    $region116: #{tpu_custom_call.1} parent=1 // pred_region
      _
    $region117: #{tpu_custom_call.1} parent=1 // pred_fallthru
      _
    // Predicated region
    $region118: #{tpu_custom_call.1} parent=1 // pred_check
      _
    $region119: #{tpu_custom_call.1} parent=1 // pred_check_branch
      %248 = sbr.rel (0) target = $region121
    $region120: #{tpu_custom_call.1} parent=1 // pred_region
      _
    $region121: #{tpu_custom_call.1} parent=1 // pred_fallthru
      _
    // Predicated region
    $region122: #{tpu_custom_call.1} parent=1 // pred_check
      _
    $region123: #{tpu_custom_call.1} parent=1 // pred_check_branch
      %250 = sbr.rel (0) target = $region125
    $region124: #{tpu_custom_call.1} parent=1 // pred_region
      _
    $region125: #{tpu_custom_call.1} parent=1 // pred_fallthru
      _
    // Predicated region
    $region126: #{tpu_custom_call.1} parent=1 // pred_check
      _
    $region127: #{tpu_custom_call.1} parent=1 // pred_check_branch
      %252 = sbr.rel (0) target = $region129
    $region128: #{tpu_custom_call.1} parent=1 // pred_region
      %254 = vsyncadd [#allocation18], 0
      %s255 = sshll.u32 %s63, 4
      %s256 = int_to_ptr.hbm [resolvable:$true] %s255
      %s257 = sshll.u32 [#allocation19], 4
      %s258 = int_to_ptr.vmem [resolvable:$true] %s257
      %263 = dma.hbm_to_vmem [thread:$0]  %s256, 2048, %s258, [#allocation18], 128, 128, 8
    $region129: #{tpu_custom_call.1} parent=1 // pred_fallthru
      _
    // Predicated region
    $region130: #{tpu_custom_call.1} parent=1 // pred_check
      _
    $region131: #{tpu_custom_call.1} parent=1 // pred_check_branch
      %265 = sbr.rel (0) target = $region133
    $region132: #{tpu_custom_call.1} parent=1 // pred_region
      _
    $region133: #{tpu_custom_call.1} parent=1 // pred_fallthru
      _
    // Predicated region
    $region134: #{tpu_custom_call.1} parent=1 // pred_check
      _
    $region135: #{tpu_custom_call.1} parent=1 // pred_check_branch
      %267 = sbr.rel (0) target = $region137
    $region136: #{tpu_custom_call.1} parent=1 // pred_region
      %269 = dma.done [#allocation3], 2048
    $region137: #{tpu_custom_call.1} parent=1 // pred_fallthru
      _
    // Predicated region
    $region138: #{tpu_custom_call.1} parent=1 // pred_check
      _
    $region139: #{tpu_custom_call.1} parent=1 // pred_check_branch
      %271 = sbr.rel (0) target = $region141
    $region140: #{tpu_custom_call.1} parent=1 // pred_region
      %273 = dma.done [#allocation6], 2048
    $region141: #{tpu_custom_call.1} parent=1 // pred_fallthru
      _
    // Predicated region
    $region142: #{tpu_custom_call.1} parent=1 // pred_check
      _
    $region143: #{tpu_custom_call.1} parent=1 // pred_check_branch
      %275 = sbr.rel (0) target = $region145
    $region144: #{tpu_custom_call.1} parent=1 // pred_region
      %277 = dma.done [#allocation6], 2048
    $region145: #{tpu_custom_call.1} parent=1 // pred_fallthru
      _
    // Predicated region
    $region146: #{tpu_custom_call.1} parent=1 // pred_check
      _
    $region147: #{tpu_custom_call.1} parent=1 // pred_check_branch
      %279 = sbr.rel (0) target = $region149
    $region148: #{tpu_custom_call.1} parent=1 // pred_region
      %281 = dma.done [#allocation9], 2048
    $region149: #{tpu_custom_call.1} parent=1 // pred_fallthru
      _
    // Predicated region
    $region150: #{tpu_custom_call.1} parent=1 // pred_check
      _
    $region151: #{tpu_custom_call.1} parent=1 // pred_check_branch
      %283 = sbr.rel (0) target = $region153
    $region152: #{tpu_custom_call.1} parent=1 // pred_region
      %285 = dma.done [#allocation9], 2048
    $region153: #{tpu_custom_call.1} parent=1 // pred_fallthru
      _
    // Predicated region
    $region154: #{tpu_custom_call.1} parent=1 // pred_check
      _
    $region155: #{tpu_custom_call.1} parent=1 // pred_check_branch
      %287 = sbr.rel (0) target = $region157
    $region156: #{tpu_custom_call.1} parent=1 // pred_region
      %289 = dma.done [#allocation12], 2048
    $region157: #{tpu_custom_call.1} parent=1 // pred_fallthru
      _
    // Predicated region
    $region158: #{tpu_custom_call.1} parent=1 // pred_check
      _
    $region159: #{tpu_custom_call.1} parent=1 // pred_check_branch
      %291 = sbr.rel (0) target = $region161
    $region160: #{tpu_custom_call.1} parent=1 // pred_region
      %293 = dma.done [#allocation12], 2048
    $region161: #{tpu_custom_call.1} parent=1 // pred_fallthru
      _
    // Predicated region
    $region162: #{tpu_custom_call.1} parent=1 // pred_check
      _
    $region163: #{tpu_custom_call.1} parent=1 // pred_check_branch
      %295 = sbr.rel (0) target = $region165
    $region164: #{tpu_custom_call.1} parent=1 // pred_region
      %297 = dma.done [#allocation15], 2048
    $region165: #{tpu_custom_call.1} parent=1 // pred_fallthru
      _
    // Predicated region
    $region166: #{tpu_custom_call.1} parent=1 // pred_check
      _
    $region167: #{tpu_custom_call.1} parent=1 // pred_check_branch
      %299 = sbr.rel (0) target = $region169
    $region168: #{tpu_custom_call.1} parent=1 // pred_region
      %301 = dma.done [#allocation15], 2048
    $region169: #{tpu_custom_call.1} parent=1 // pred_fallthru
      _
    // Predicated region
    $region170: #{tpu_custom_call.1} parent=1 // pred_check
      _
    $region171: #{tpu_custom_call.1} parent=1 // pred_check_branch
      %303 = sbr.rel (0) target = $region173
    $region172: #{tpu_custom_call.1} parent=1 // pred_region
      %305 = dma.done [#allocation18], 2048
    $region173: #{tpu_custom_call.1} parent=1 // pred_fallthru
      _
    // Predicated region
    $region174: #{tpu_custom_call.1} parent=1 // pred_check
      _
    $region175: #{tpu_custom_call.1} parent=1 // pred_check_branch
      %307 = sbr.rel (0) target = $region177
    $region176: #{tpu_custom_call.1} parent=1 // pred_region
      %309 = dma.done [#allocation18], 2048
    $region177: #{tpu_custom_call.1} parent=1 // pred_fallthru
      _
    %v310 = vld [vmem:[%s3] sm:$0xff]
    %v311 = vld [vmem:[%s3 + $0x8] sm:$0xff]
    %v312 = vld [vmem:[%s5] sm:$0xff]
    %v313 = vld [vmem:[%s5 + $0x8] sm:$0xff]
    %v314 = vld [vmem:[%s7] sm:$0xff]
    %v315 = vld [vmem:[%s1] sm:$0xff]
    %v316 = vld [vmem:[%s1 + $0x8] sm:$0xff]
    %v317 = vld [vmem:[%s11] sm:$0x1]
    %v318 = vld [vmem:[%s9] sm:$0xf]
    %vm319 = vcmask 31744
    %v321 = vsel %vm319, %v315, 0
    %v324 = vsel %vm319, %v316, 0
    %vm326 = vcmask 1043456
    %v328 = vsel %vm326, %v318, 0
    %330 = vmatpush.msra.mxu0 0.0
    %331 = vmatpush.msra.mxu0 0.0
    %332 = vmatpush.msra.mxu0 0.0
    %333 = vmatpush.msra.mxu0 0.0
    %334 = vmatpush.msra.mxu0 0.0
    %335 = vmatpush.msra.mxu0 0.0
    %336 = vmatpush.msra.mxu0 0.0
    %337 = vmatpush.msra.mxu0 0.0
    %338 = vmatpush.msra.mxu0 0.0
    %339 = vmatpush.msra.mxu0 0.0
    %340 = vmatpush.msra.mxu0 0.0
    %341 = vmatpush.msra.mxu0 0.0
    %342 = vmatpush.msra.mxu0 0.0
    %343 = vmatpush.msra.mxu0 0.0
    %344 = vmatpush.msra.mxu0 0.0
    %345 = vmatpush.msra.mxu0 %v328
    %346 = vmatmul.f32.gmra.mxu0 %v321
    %v347 = vpop.f32.mrf.mxu0
    %v348 = vadd.f32 0.0, %v347
    %349 = vmatmul.f32.gmra.mxu0 %v324
    %v350 = vpop.f32.mrf.mxu0
    %v351 = vadd.f32 0.0, %v350
    %352 = vdwg.mxu0
    %v354 = vperm.slane %v317, 0
    %v356 = vadd.f32 %v354, %v348
    %v357 = vadd.f32 %v354, %v351
    %vm358 = vcmp.gt.f32.partialorder %v356, 0.0
    %vm359 = vcmp.gt.f32.partialorder %v357, 0.0
    %v360 = vmin.f32 %v356, 0.0
    %v361 = vmin.f32 %v357, 0.0
    %v362 = vmul.f32 %v360, 1.442695
    %v363 = vpow.pop %v362
    %v364 = vmul.f32 %v361, 1.442695
    %v365 = vpow.pop %v364
    %v366 = vsub.f32 %v363, 1.0
    %v367 = vsub.f32 %v365, 1.0
    %v368 = vsel %vm358, %v356, %v366
    %v369 = vsel %vm359, %v357, %v367
    %v370 = vld [vmem:[#allocation2] sm:$0xff]
    %v371 = vld [vmem:[#allocation2 + $0x8] sm:$0xff]
    %v372 = vld [vmem:[#allocation2 + $0x10] sm:$0xff]
    %v373 = vld [vmem:[#allocation2 + $0x18] sm:$0xff]
    %v374 = vld [vmem:[#allocation2 + $0x20] sm:$0xff]
    %v375 = vld [vmem:[#allocation2 + $0x28] sm:$0xff]
    %v376 = vld [vmem:[#allocation2 + $0x30] sm:$0xff]
    %v377 = vld [vmem:[#allocation2 + $0x38] sm:$0xff]
    %v378 = vld [vmem:[#allocation2 + $0x40] sm:$0xff]
    %v379 = vld [vmem:[#allocation2 + $0x48] sm:$0xff]
    %v380 = vld [vmem:[#allocation2 + $0x50] sm:$0xff]
    %v381 = vld [vmem:[#allocation2 + $0x58] sm:$0xff]
    %v382 = vld [vmem:[#allocation2 + $0x60] sm:$0xff]
    %v383 = vld [vmem:[#allocation2 + $0x68] sm:$0xff]
    %v384 = vld [vmem:[#allocation2 + $0x70] sm:$0xff]
    %v385 = vld [vmem:[#allocation2 + $0x78] sm:$0xff]
    %v386 = vld [vmem:[%s15] sm:$0x1]
    %v388 = vperm.slane %v386, 0
    %390 = vmatpush.msra.mxu0 %v385
    %391 = vmatpush.msra.mxu0 %v384
    %392 = vmatpush.msra.mxu0 %v383
    %393 = vmatpush.msra.mxu0 %v382
    %394 = vmatpush.msra.mxu0 %v381
    %395 = vmatpush.msra.mxu0 %v380
    %396 = vmatpush.msra.mxu0 %v379
    %397 = vmatpush.msra.mxu0 %v378
    %398 = vmatpush.msra.mxu0 %v377
    %399 = vmatpush.msra.mxu0 %v376
    %400 = vmatpush.msra.mxu0 %v375
    %401 = vmatpush.msra.mxu0 %v374
    %402 = vmatpush.msra.mxu0 %v373
    %403 = vmatpush.msra.mxu0 %v372
    %404 = vmatpush.msra.mxu0 %v371
    %405 = vmatpush.msra.mxu0 %v370
    %406 = vmatmul.f32.gmra.mxu0 %v368
    %v407 = vpop.f32.mrf.mxu0
    %v408 = vadd.f32 %v388, %v407
    %409 = vmatmul.f32.gmra.mxu0 %v369
    %v410 = vpop.f32.mrf.mxu0
    %v411 = vadd.f32 %v388, %v410
    %412 = vdwg.mxu0
    %vm413 = vcmp.gt.f32.partialorder %v408, 0.0
    %vm414 = vcmp.gt.f32.partialorder %v411, 0.0
    %v415 = vmin.f32 %v408, 0.0
    %v416 = vmin.f32 %v411, 0.0
    %v417 = vmul.f32 %v415, 1.442695
    %v418 = vpow.pop %v417
    %v419 = vmul.f32 %v416, 1.442695
    %v420 = vpow.pop %v419
    %v421 = vsub.f32 %v418, 1.0
    %v422 = vsub.f32 %v420, 1.0
    %v423 = vsel %vm413, %v408, %v421
    %v424 = vsel %vm414, %v411, %v422
    %v425 = vadd.f32 %v423, %v424
    %v426 = vrot.slane %v425, 4
    %v427 = vadd.f32 %v425, %v426
    %v428 = vrot.slane %v427, 2
    %v429 = vadd.f32 %v427, %v428
    %v430 = vrot.slane %v429, 1
    %v431 = vadd.f32 %v429, %v430
    %v432 = vrcp.pop 16.0
    %v433 = vmul.f32 16.0, %v432
    %v434 = vsub.f32 1.0, %v433
    %v435 = vmul.f32 %v432, %v434
    %v436 = vadd.f32 %v432, %v435
    %vm437 = vweird.f32 %v432
    %v438 = vsel %vm437, %v432, %v436
    %v439 = vmul.f32 %v431, %v438
    %v440 = vsub.f32 %v423, %v439
    %v441 = vsub.f32 %v424, %v439
    %v442 = vmul.f32 %v440, %v440
    %v443 = vmul.f32 %v441, %v441
    %v444 = vadd.f32 %v442, %v443
    %v445 = vrot.slane %v444, 4
    %v446 = vadd.f32 %v444, %v445
    %v447 = vrot.slane %v446, 2
    %v448 = vadd.f32 %v446, %v447
    %v449 = vrot.slane %v448, 1
    %v450 = vadd.f32 %v448, %v449
    %v451 = vmul.f32 %v450, %v438
    %v452 = vadd.f32 %v451, 1e-05
    %v453 = vrsqrt.pop %v452
    %v454 = vmul.f32 %v453, %v452
    %v455 = vmul.f32 %v454, %v453
    %v456 = vmul.f32 0.5, %v455
    %v457 = vsub.f32 1.5, %v456
    %v458 = vmul.f32 %v453, %v457
    %vm459 = vweird.f32 %v452
    %vm460 = vweird.f32 %v453
    %vm461 = vmor %vm459, %vm460
    %v462 = vsel %vm461, %v453, %v458
    %v463 = vmul.f32 %v440, %v462
    %v464 = vmul.f32 %v441, %v462
    %v465 = vld [vmem:[%s17] sm:$0x1]
    %v467 = vperm.slane %v465, 0
    %v469 = vmul.f32 %v463, %v467
    %v470 = vmul.f32 %v464, %v467
    %v471 = vld [vmem:[%s19] sm:$0x1]
    %v473 = vperm.slane %v471, 0
    %v475 = vadd.f32 %v469, %v473
    %v476 = vadd.f32 %v470, %v473
    %vm477 = vcmask 64512
    %v479 = vsel %vm477, %v310, 0
    %v482 = vsel %vm477, %v311, 0
    %484 = vmatpush.msra.mxu0 0.0
    %485 = vmatpush.msra.mxu0 0.0
    %486 = vmatpush.msra.mxu0 0.0
    %487 = vmatpush.msra.mxu0 0.0
    %488 = vmatpush.msra.mxu0 0.0
    %489 = vmatpush.msra.mxu0 0.0
    %490 = vmatpush.msra.mxu0 0.0
    %491 = vmatpush.msra.mxu0 0.0
    %492 = vmatpush.msra.mxu0 0.0
    %493 = vmatpush.msra.mxu0 0.0
    %494 = vmatpush.msra.mxu0 0.0
    %495 = vmatpush.msra.mxu0 0.0
    %496 = vmatpush.msra.mxu0 0.0
    %497 = vmatpush.msra.mxu0 0.0
    %498 = vmatpush.msra.mxu0 0.0
    %499 = vmatpush.msra.mxu0 %v475
    %500 = vmatmul.f32.gmra.mxu0 %v479
    %v501 = vpop.f32.mrf.mxu0
    %v502 = vadd.f32 0.0, %v501
    %503 = vmatmul.f32.gmra.mxu0 %v482
    %v504 = vpop.f32.mrf.mxu0
    %v505 = vadd.f32 0.0, %v504
    %506 = vdwg.mxu0
    %507 = vmatpush.msra.mxu0 0.0
    %508 = vmatpush.msra.mxu0 0.0
    %509 = vmatpush.msra.mxu0 0.0
    %510 = vmatpush.msra.mxu0 0.0
    %511 = vmatpush.msra.mxu0 0.0
    %512 = vmatpush.msra.mxu0 0.0
    %513 = vmatpush.msra.mxu0 0.0
    %514 = vmatpush.msra.mxu0 0.0
    %515 = vmatpush.msra.mxu0 0.0
    %516 = vmatpush.msra.mxu0 0.0
    %517 = vmatpush.msra.mxu0 0.0
    %518 = vmatpush.msra.mxu0 0.0
    %519 = vmatpush.msra.mxu0 0.0
    %520 = vmatpush.msra.mxu0 0.0
    %521 = vmatpush.msra.mxu0 0.0
    %522 = vmatpush.msra.mxu0 %v476
    %523 = vmatmul.f32.gmra.mxu0 %v479
    %v524 = vpop.f32.mrf.mxu0
    %v525 = vadd.f32 0.0, %v524
    %526 = vmatmul.f32.gmra.mxu0 %v482
    %v527 = vpop.f32.mrf.mxu0
    %v528 = vadd.f32 0.0, %v527
    %529 = vdwg.mxu0
    %v531 = vsel %vm477, %v312, 0
    %v534 = vsel %vm477, %v313, 0
    %536 = vmatpush.msra.mxu0 0.0
    %537 = vmatpush.msra.mxu0 0.0
    %538 = vmatpush.msra.mxu0 0.0
    %539 = vmatpush.msra.mxu0 0.0
    %540 = vmatpush.msra.mxu0 0.0
    %541 = vmatpush.msra.mxu0 0.0
    %542 = vmatpush.msra.mxu0 0.0
    %543 = vmatpush.msra.mxu0 0.0
    %544 = vmatpush.msra.mxu0 0.0
    %545 = vmatpush.msra.mxu0 0.0
    %546 = vmatpush.msra.mxu0 0.0
    %547 = vmatpush.msra.mxu0 0.0
    %548 = vmatpush.msra.mxu0 0.0
    %549 = vmatpush.msra.mxu0 0.0
    %550 = vmatpush.msra.mxu0 0.0
    %551 = vmatpush.msra.mxu0 %v475
    %552 = vmatmul.f32.gmra.mxu0 %v531
    %v553 = vpop.f32.mrf.mxu0
    %v554 = vadd.f32 0.0, %v553
    %555 = vmatmul.f32.gmra.mxu0 %v534
    %v556 = vpop.f32.mrf.mxu0
    %v557 = vadd.f32 0.0, %v556
    %558 = vdwg.mxu0
    %559 = vmatpush.msra.mxu0 0.0
    %560 = vmatpush.msra.mxu0 0.0
    %561 = vmatpush.msra.mxu0 0.0
    %562 = vmatpush.msra.mxu0 0.0
    %563 = vmatpush.msra.mxu0 0.0
    %564 = vmatpush.msra.mxu0 0.0
    %565 = vmatpush.msra.mxu0 0.0
    %566 = vmatpush.msra.mxu0 0.0
    %567 = vmatpush.msra.mxu0 0.0
    %568 = vmatpush.msra.mxu0 0.0
    %569 = vmatpush.msra.mxu0 0.0
    %570 = vmatpush.msra.mxu0 0.0
    %571 = vmatpush.msra.mxu0 0.0
    %572 = vmatpush.msra.mxu0 0.0
    %573 = vmatpush.msra.mxu0 0.0
    %574 = vmatpush.msra.mxu0 %v476
    %575 = vmatmul.f32.gmra.mxu0 %v531
    %v576 = vpop.f32.mrf.mxu0
    %v577 = vadd.f32 0.0, %v576
    %578 = vmatmul.f32.gmra.mxu0 %v534
    %v579 = vpop.f32.mrf.mxu0
    %v580 = vadd.f32 0.0, %v579
    %581 = vdwg.mxu0
    %v582 = vld [vmem:[%s25] sm:$0x1]
    %v583 = vld [vmem:[#allocation5] sm:$0xff]
    %v584 = vld [vmem:[#allocation5 + $0x8] sm:$0xff]
    %v585 = vld [vmem:[#allocation5 + $0x10] sm:$0xff]
    %v586 = vld [vmem:[#allocation5 + $0x18] sm:$0xff]
    %v587 = vld [vmem:[#allocation5 + $0x20] sm:$0xff]
    %v588 = vld [vmem:[#allocation5 + $0x28] sm:$0xff]
    %v589 = vld [vmem:[#allocation5 + $0x30] sm:$0xff]
    %v590 = vld [vmem:[#allocation5 + $0x38] sm:$0xff]
    %v591 = vld [vmem:[#allocation5 + $0x40] sm:$0xff]
    %v592 = vld [vmem:[#allocation5 + $0x48] sm:$0xff]
    %v593 = vld [vmem:[#allocation5 + $0x50] sm:$0xff]
    %v594 = vld [vmem:[#allocation5 + $0x58] sm:$0xff]
    %v595 = vld [vmem:[#allocation5 + $0x60] sm:$0xff]
    %v596 = vld [vmem:[#allocation5 + $0x68] sm:$0xff]
    %v597 = vld [vmem:[#allocation5 + $0x70] sm:$0xff]
    %v598 = vld [vmem:[#allocation5 + $0x78] sm:$0xff]
    %599 = vmatpush.msra.mxu0 %v598
    %600 = vmatpush.msra.mxu0 %v597
    %601 = vmatpush.msra.mxu0 %v596
    %602 = vmatpush.msra.mxu0 %v595
    %603 = vmatpush.msra.mxu0 %v594
    %604 = vmatpush.msra.mxu0 %v593
    %605 = vmatpush.msra.mxu0 %v592
    %606 = vmatpush.msra.mxu0 %v591
    %607 = vmatpush.msra.mxu0 %v590
    %608 = vmatpush.msra.mxu0 %v589
    %609 = vmatpush.msra.mxu0 %v588
    %610 = vmatpush.msra.mxu0 %v587
    %611 = vmatpush.msra.mxu0 %v586
    %612 = vmatpush.msra.mxu0 %v585
    %613 = vmatpush.msra.mxu0 %v584
    %614 = vmatpush.msra.mxu0 %v583
    %615 = vmatmul.f32.gmra.mxu0 %v502
    %v616 = vpop.f32.mrf.mxu0
    %v617 = vadd.f32 0.0, %v616
    %618 = vmatmul.f32.gmra.mxu0 %v505
    %v619 = vpop.f32.mrf.mxu0
    %v620 = vadd.f32 0.0, %v619
    %621 = vmatmul.f32.gmra.mxu0 %v525
    %v622 = vpop.f32.mrf.mxu0
    %v623 = vadd.f32 0.0, %v622
    %624 = vmatmul.f32.gmra.mxu0 %v528
    %v625 = vpop.f32.mrf.mxu0
    %v626 = vadd.f32 0.0, %v625
    %627 = vdwg.mxu0
    %v629 = vperm.slane %v582, 0
    %v631 = vadd.f32 %v629, %v617
    %v632 = vadd.f32 %v629, %v620
    %v633 = vadd.f32 %v629, %v623
    %v634 = vadd.f32 %v629, %v626
    %v635 = vld [vmem:[#allocation7] sm:$0xff]
    %v636 = vld [vmem:[#allocation7 + $0x8] sm:$0xff]
    %v637 = vld [vmem:[#allocation7 + $0x10] sm:$0xff]
    %v638 = vld [vmem:[#allocation7 + $0x18] sm:$0xff]
    %v639 = vld [vmem:[#allocation7 + $0x20] sm:$0xff]
    %v640 = vld [vmem:[#allocation7 + $0x28] sm:$0xff]
    %v641 = vld [vmem:[#allocation7 + $0x30] sm:$0xff]
    %v642 = vld [vmem:[#allocation7 + $0x38] sm:$0xff]
    %v643 = vld [vmem:[#allocation7 + $0x40] sm:$0xff]
    %v644 = vld [vmem:[#allocation7 + $0x48] sm:$0xff]
    %v645 = vld [vmem:[#allocation7 + $0x50] sm:$0xff]
    %v646 = vld [vmem:[#allocation7 + $0x58] sm:$0xff]
    %v647 = vld [vmem:[#allocation7 + $0x60] sm:$0xff]
    %v648 = vld [vmem:[#allocation7 + $0x68] sm:$0xff]
    %v649 = vld [vmem:[#allocation7 + $0x70] sm:$0xff]
    %v650 = vld [vmem:[#allocation7 + $0x78] sm:$0xff]
    %651 = vmatpush.msra.mxu0 %v650
    %652 = vmatpush.msra.mxu0 %v649
    %653 = vmatpush.msra.mxu0 %v648
    %654 = vmatpush.msra.mxu0 %v647
    %655 = vmatpush.msra.mxu0 %v646
    %656 = vmatpush.msra.mxu0 %v645
    %657 = vmatpush.msra.mxu0 %v644
    %658 = vmatpush.msra.mxu0 %v643
    %659 = vmatpush.msra.mxu0 %v642
    %660 = vmatpush.msra.mxu0 %v641
    %661 = vmatpush.msra.mxu0 %v640
    %662 = vmatpush.msra.mxu0 %v639
    %663 = vmatpush.msra.mxu0 %v638
    %664 = vmatpush.msra.mxu0 %v637
    %665 = vmatpush.msra.mxu0 %v636
    %666 = vmatpush.msra.mxu0 %v635
    %667 = vmatmul.f32.gmra.mxu0 %v554
    %v668 = vpop.f32.mrf.mxu0
    %v669 = vadd.f32 0.0, %v668
    %670 = vmatmul.f32.gmra.mxu0 %v557
    %v671 = vpop.f32.mrf.mxu0
    %v672 = vadd.f32 0.0, %v671
    %673 = vmatmul.f32.gmra.mxu0 %v577
    %v674 = vpop.f32.mrf.mxu0
    %v675 = vadd.f32 0.0, %v674
    %676 = vmatmul.f32.gmra.mxu0 %v580
    %v677 = vpop.f32.mrf.mxu0
    %v678 = vadd.f32 0.0, %v677
    %679 = vdwg.mxu0
    %v680 = vadd.f32 %v631, %v669
    %v681 = vadd.f32 %v632, %v672
    %v682 = vadd.f32 %v633, %v675
    %v683 = vadd.f32 %v634, %v678
    %vm684 = vcmp.gt.f32.partialorder %v680, 0.0
    %vm685 = vcmp.gt.f32.partialorder %v681, 0.0
    %vm686 = vcmp.gt.f32.partialorder %v682, 0.0
    %vm687 = vcmp.gt.f32.partialorder %v683, 0.0
    %v688 = vmin.f32 %v680, 0.0
    %v689 = vmin.f32 %v681, 0.0
    %v690 = vmin.f32 %v682, 0.0
    %v691 = vmin.f32 %v683, 0.0
    %v692 = vmul.f32 %v688, 1.442695
    %v693 = vpow.pop %v692
    %v694 = vmul.f32 %v689, 1.442695
    %v695 = vpow.pop %v694
    %v696 = vmul.f32 %v690, 1.442695
    %v697 = vpow.pop %v696
    %v698 = vmul.f32 %v691, 1.442695
    %v699 = vpow.pop %v698
    %v700 = vsub.f32 %v693, 1.0
    %v701 = vsub.f32 %v695, 1.0
    %v702 = vsub.f32 %v697, 1.0
    %v703 = vsub.f32 %v699, 1.0
    %v704 = vsel %vm684, %v680, %v700
    %v705 = vsel %vm685, %v681, %v701
    %v706 = vsel %vm686, %v682, %v702
    %v707 = vsel %vm687, %v683, %v703
    %v708 = vld [vmem:[#allocation8] sm:$0xff]
    %v709 = vld [vmem:[#allocation8 + $0x8] sm:$0xff]
    %v710 = vld [vmem:[#allocation8 + $0x10] sm:$0xff]
    %v711 = vld [vmem:[#allocation8 + $0x18] sm:$0xff]
    %v712 = vld [vmem:[#allocation8 + $0x20] sm:$0xff]
    %v713 = vld [vmem:[#allocation8 + $0x28] sm:$0xff]
    %v714 = vld [vmem:[#allocation8 + $0x30] sm:$0xff]
    %v715 = vld [vmem:[#allocation8 + $0x38] sm:$0xff]
    %v716 = vld [vmem:[#allocation8 + $0x40] sm:$0xff]
    %v717 = vld [vmem:[#allocation8 + $0x48] sm:$0xff]
    %v718 = vld [vmem:[#allocation8 + $0x50] sm:$0xff]
    %v719 = vld [vmem:[#allocation8 + $0x58] sm:$0xff]
    %v720 = vld [vmem:[#allocation8 + $0x60] sm:$0xff]
    %v721 = vld [vmem:[#allocation8 + $0x68] sm:$0xff]
    %v722 = vld [vmem:[#allocation8 + $0x70] sm:$0xff]
    %v723 = vld [vmem:[#allocation8 + $0x78] sm:$0xff]
    %v724 = vld [vmem:[%s29] sm:$0x1]
    %v726 = vperm.slane %v724, 0
    %728 = vmatpush.msra.mxu0 %v723
    %729 = vmatpush.msra.mxu0 %v722
    %730 = vmatpush.msra.mxu0 %v721
    %731 = vmatpush.msra.mxu0 %v720
    %732 = vmatpush.msra.mxu0 %v719
    %733 = vmatpush.msra.mxu0 %v718
    %734 = vmatpush.msra.mxu0 %v717
    %735 = vmatpush.msra.mxu0 %v716
    %736 = vmatpush.msra.mxu0 %v715
    %737 = vmatpush.msra.mxu0 %v714
    %738 = vmatpush.msra.mxu0 %v713
    %739 = vmatpush.msra.mxu0 %v712
    %740 = vmatpush.msra.mxu0 %v711
    %741 = vmatpush.msra.mxu0 %v710
    %742 = vmatpush.msra.mxu0 %v709
    %743 = vmatpush.msra.mxu0 %v708
    %744 = vmatmul.f32.gmra.mxu0 %v704
    %v745 = vpop.f32.mrf.mxu0
    %v746 = vadd.f32 %v726, %v745
    %747 = vmatmul.f32.gmra.mxu0 %v705
    %v748 = vpop.f32.mrf.mxu0
    %v749 = vadd.f32 %v726, %v748
    %750 = vmatmul.f32.gmra.mxu0 %v706
    %v751 = vpop.f32.mrf.mxu0
    %v752 = vadd.f32 %v726, %v751
    %753 = vmatmul.f32.gmra.mxu0 %v707
    %v754 = vpop.f32.mrf.mxu0
    %v755 = vadd.f32 %v726, %v754
    %756 = vdwg.mxu0
    %vm757 = vcmp.gt.f32.partialorder %v746, 0.0
    %vm758 = vcmp.gt.f32.partialorder %v749, 0.0
    %vm759 = vcmp.gt.f32.partialorder %v752, 0.0
    %vm760 = vcmp.gt.f32.partialorder %v755, 0.0
    %v761 = vmin.f32 %v746, 0.0
    %v762 = vmin.f32 %v749, 0.0
    %v763 = vmin.f32 %v752, 0.0
    %v764 = vmin.f32 %v755, 0.0
    %v765 = vmul.f32 %v761, 1.442695
    %v766 = vpow.pop %v765
    %v767 = vmul.f32 %v762, 1.442695
    %v768 = vpow.pop %v767
    %v769 = vmul.f32 %v763, 1.442695
    %v770 = vpow.pop %v769
    %v771 = vmul.f32 %v764, 1.442695
    %v772 = vpow.pop %v771
    %v773 = vsub.f32 %v766, 1.0
    %v774 = vsub.f32 %v768, 1.0
    %v775 = vsub.f32 %v770, 1.0
    %v776 = vsub.f32 %v772, 1.0
    %v777 = vsel %vm757, %v746, %v773
    %v778 = vsel %vm758, %v749, %v774
    %v779 = vsel %vm759, %v752, %v775
    %v780 = vsel %vm760, %v755, %v776
    %v781 = vadd.f32 %v777, %v778
    %v782 = vadd.f32 %v781, %v779
    %v783 = vadd.f32 %v782, %v780
    %v784 = vrot.slane %v783, 4
    %v785 = vadd.f32 %v783, %v784
    %v786 = vrot.slane %v785, 2
    %v787 = vadd.f32 %v785, %v786
    %v788 = vrot.slane %v787, 1
    %v789 = vadd.f32 %v787, %v788
    %v790 = vrcp.pop 32.0
    %v791 = vmul.f32 32.0, %v790
    %v792 = vsub.f32 1.0, %v791
    %v793 = vmul.f32 %v790, %v792
    %v794 = vadd.f32 %v790, %v793
    %vm795 = vweird.f32 %v790
    %v796 = vsel %vm795, %v790, %v794
    %v797 = vmul.f32 %v789, %v796
    %v798 = vsub.f32 %v777, %v797
    %v799 = vsub.f32 %v778, %v797
    %v800 = vsub.f32 %v779, %v797
    %v801 = vsub.f32 %v780, %v797
    %v802 = vmul.f32 %v798, %v798
    %v803 = vmul.f32 %v799, %v799
    %v804 = vmul.f32 %v800, %v800
    %v805 = vmul.f32 %v801, %v801
    %v806 = vadd.f32 %v802, %v803
    %v807 = vadd.f32 %v806, %v804
    %v808 = vadd.f32 %v807, %v805
    %v809 = vrot.slane %v808, 4
    %v810 = vadd.f32 %v808, %v809
    %v811 = vrot.slane %v810, 2
    %v812 = vadd.f32 %v810, %v811
    %v813 = vrot.slane %v812, 1
    %v814 = vadd.f32 %v812, %v813
    %v815 = vmul.f32 %v814, %v796
    %v816 = vadd.f32 %v815, 1e-05
    %v817 = vrsqrt.pop %v816
    %v818 = vmul.f32 %v817, %v816
    %v819 = vmul.f32 %v818, %v817
    %v820 = vmul.f32 0.5, %v819
    %v821 = vsub.f32 1.5, %v820
    %v822 = vmul.f32 %v817, %v821
    %vm823 = vweird.f32 %v816
    %vm824 = vweird.f32 %v817
    %vm825 = vmor %vm823, %vm824
    %v826 = vsel %vm825, %v817, %v822
    %v827 = vmul.f32 %v798, %v826
    %v828 = vmul.f32 %v799, %v826
    %v829 = vmul.f32 %v800, %v826
    %v830 = vmul.f32 %v801, %v826
    %v831 = vld [vmem:[%s31] sm:$0x1]
    %v833 = vperm.slane %v831, 0
    %v835 = vmul.f32 %v827, %v833
    %v836 = vmul.f32 %v828, %v833
    %v837 = vmul.f32 %v829, %v833
    %v838 = vmul.f32 %v830, %v833
    %v839 = vld [vmem:[%s33] sm:$0x1]
    %v841 = vperm.slane %v839, 0
    %v843 = vadd.f32 %v835, %v841
    %v844 = vadd.f32 %v836, %v841
    %v845 = vadd.f32 %v837, %v841
    %v846 = vadd.f32 %v838, %v841
    %vm847 = vcmask 130048
    %v849 = vsel %vm847, %v314, 0
    %851 = vmatpush.msra.mxu0 0.0
    %852 = vmatpush.msra.mxu0 0.0
    %853 = vmatpush.msra.mxu0 0.0
    %854 = vmatpush.msra.mxu0 0.0
    %855 = vmatpush.msra.mxu0 0.0
    %856 = vmatpush.msra.mxu0 0.0
    %857 = vmatpush.msra.mxu0 0.0
    %858 = vmatpush.msra.mxu0 0.0
    %859 = vmatpush.msra.mxu0 0.0
    %860 = vmatpush.msra.mxu0 0.0
    %861 = vmatpush.msra.mxu0 0.0
    %862 = vmatpush.msra.mxu0 0.0
    %863 = vmatpush.msra.mxu0 0.0
    %864 = vmatpush.msra.mxu0 0.0
    %865 = vmatpush.msra.mxu0 %v844
    %866 = vmatpush.msra.mxu0 %v843
    %867 = vmatmul.f32.gmra.mxu0 %v849
    %v868 = vpop.f32.mrf.mxu0
    %v869 = vadd.f32 0.0, %v868
    %870 = vdwg.mxu0
    %871 = vmatpush.msra.mxu0 0.0
    %872 = vmatpush.msra.mxu0 0.0
    %873 = vmatpush.msra.mxu0 0.0
    %874 = vmatpush.msra.mxu0 0.0
    %875 = vmatpush.msra.mxu0 0.0
    %876 = vmatpush.msra.mxu0 0.0
    %877 = vmatpush.msra.mxu0 0.0
    %878 = vmatpush.msra.mxu0 0.0
    %879 = vmatpush.msra.mxu0 0.0
    %880 = vmatpush.msra.mxu0 0.0
    %881 = vmatpush.msra.mxu0 0.0
    %882 = vmatpush.msra.mxu0 0.0
    %883 = vmatpush.msra.mxu0 0.0
    %884 = vmatpush.msra.mxu0 0.0
    %885 = vmatpush.msra.mxu0 %v846
    %886 = vmatpush.msra.mxu0 %v845
    %887 = vmatmul.f32.gmra.mxu0 %v849
    %v888 = vpop.f32.mrf.mxu0
    %v889 = vadd.f32 0.0, %v888
    %890 = vdwg.mxu0
    %v891 = vmul.f32 %v869, 0.125
    %v892 = vmul.f32 %v889, 0.125
    %v893 = vld [vmem:[%s37] sm:$0x1]
    %v894 = vld [vmem:[#allocation10] sm:$0xff]
    %v895 = vld [vmem:[#allocation10 + $0x8] sm:$0xff]
    %v896 = vld [vmem:[#allocation10 + $0x10] sm:$0xff]
    %v897 = vld [vmem:[#allocation10 + $0x18] sm:$0xff]
    %v898 = vld [vmem:[#allocation10 + $0x20] sm:$0xff]
    %v899 = vld [vmem:[#allocation10 + $0x28] sm:$0xff]
    %v900 = vld [vmem:[#allocation10 + $0x30] sm:$0xff]
    %v901 = vld [vmem:[#allocation10 + $0x38] sm:$0xff]
    %v902 = vld [vmem:[#allocation10 + $0x40] sm:$0xff]
    %v903 = vld [vmem:[#allocation10 + $0x48] sm:$0xff]
    %v904 = vld [vmem:[#allocation10 + $0x50] sm:$0xff]
    %v905 = vld [vmem:[#allocation10 + $0x58] sm:$0xff]
    %v906 = vld [vmem:[#allocation10 + $0x60] sm:$0xff]
    %v907 = vld [vmem:[#allocation10 + $0x68] sm:$0xff]
    %v908 = vld [vmem:[#allocation10 + $0x70] sm:$0xff]
    %v909 = vld [vmem:[#allocation10 + $0x78] sm:$0xff]
    %910 = vmatpush.msra.mxu0 %v909
    %911 = vmatpush.msra.mxu0 %v908
    %912 = vmatpush.msra.mxu0 %v907
    %913 = vmatpush.msra.mxu0 %v906
    %914 = vmatpush.msra.mxu0 %v905
    %915 = vmatpush.msra.mxu0 %v904
    %916 = vmatpush.msra.mxu0 %v903
    %917 = vmatpush.msra.mxu0 %v902
    %918 = vmatpush.msra.mxu0 %v901
    %919 = vmatpush.msra.mxu0 %v900
    %920 = vmatpush.msra.mxu0 %v899
    %921 = vmatpush.msra.mxu0 %v898
    %922 = vmatpush.msra.mxu0 %v897
    %923 = vmatpush.msra.mxu0 %v896
    %924 = vmatpush.msra.mxu0 %v895
    %925 = vmatpush.msra.mxu0 %v894
    %926 = vmatmul.f32.gmra.mxu0 %v891
    %v927 = vpop.f32.mrf.mxu0
    %v928 = vadd.f32 0.0, %v927
    %929 = vmatmul.f32.gmra.mxu0 %v892
    %v930 = vpop.f32.mrf.mxu0
    %v931 = vadd.f32 0.0, %v930
    %932 = vdwg.mxu0
    %v934 = vperm.slane %v893, 0
    %v936 = vadd.f32 %v934, %v928
    %v937 = vadd.f32 %v934, %v931
    %vm938 = vcmp.gt.f32.partialorder %v936, 0.0
    %vm939 = vcmp.gt.f32.partialorder %v937, 0.0
    %v940 = vmin.f32 %v936, 0.0
    %v941 = vmin.f32 %v937, 0.0
    %v942 = vmul.f32 %v940, 1.442695
    %v943 = vpow.pop %v942
    %v944 = vmul.f32 %v941, 1.442695
    %v945 = vpow.pop %v944
    %v946 = vsub.f32 %v943, 1.0
    %v947 = vsub.f32 %v945, 1.0
    %v948 = vsel %vm938, %v936, %v946
    %v949 = vsel %vm939, %v937, %v947
    %v950 = vld [vmem:[#allocation11] sm:$0xff]
    %v951 = vld [vmem:[#allocation11 + $0x8] sm:$0xff]
    %v952 = vld [vmem:[#allocation11 + $0x10] sm:$0xff]
    %v953 = vld [vmem:[#allocation11 + $0x18] sm:$0xff]
    %v954 = vld [vmem:[#allocation11 + $0x20] sm:$0xff]
    %v955 = vld [vmem:[#allocation11 + $0x28] sm:$0xff]
    %v956 = vld [vmem:[#allocation11 + $0x30] sm:$0xff]
    %v957 = vld [vmem:[#allocation11 + $0x38] sm:$0xff]
    %v958 = vld [vmem:[#allocation11 + $0x40] sm:$0xff]
    %v959 = vld [vmem:[#allocation11 + $0x48] sm:$0xff]
    %v960 = vld [vmem:[#allocation11 + $0x50] sm:$0xff]
    %v961 = vld [vmem:[#allocation11 + $0x58] sm:$0xff]
    %v962 = vld [vmem:[#allocation11 + $0x60] sm:$0xff]
    %v963 = vld [vmem:[#allocation11 + $0x68] sm:$0xff]
    %v964 = vld [vmem:[#allocation11 + $0x70] sm:$0xff]
    %v965 = vld [vmem:[#allocation11 + $0x78] sm:$0xff]
    %v966 = vld [vmem:[%s41] sm:$0x1]
    %v968 = vperm.slane %v966, 0
    %970 = vmatpush.msra.mxu0 %v965
    %971 = vmatpush.msra.mxu0 %v964
    %972 = vmatpush.msra.mxu0 %v963
    %973 = vmatpush.msra.mxu0 %v962
    %974 = vmatpush.msra.mxu0 %v961
    %975 = vmatpush.msra.mxu0 %v960
    %976 = vmatpush.msra.mxu0 %v959
    %977 = vmatpush.msra.mxu0 %v958
    %978 = vmatpush.msra.mxu0 %v957
    %979 = vmatpush.msra.mxu0 %v956
    %980 = vmatpush.msra.mxu0 %v955
    %981 = vmatpush.msra.mxu0 %v954
    %982 = vmatpush.msra.mxu0 %v953
    %983 = vmatpush.msra.mxu0 %v952
    %984 = vmatpush.msra.mxu0 %v951
    %985 = vmatpush.msra.mxu0 %v950
    %986 = vmatmul.f32.gmra.mxu0 %v948
    %v987 = vpop.f32.mrf.mxu0
    %v988 = vadd.f32 %v968, %v987
    %989 = vmatmul.f32.gmra.mxu0 %v949
    %v990 = vpop.f32.mrf.mxu0
    %v991 = vadd.f32 %v968, %v990
    %992 = vdwg.mxu0
    %vm993 = vcmp.gt.f32.partialorder %v988, 0.0
    %vm994 = vcmp.gt.f32.partialorder %v991, 0.0
    %v995 = vmin.f32 %v988, 0.0
    %v996 = vmin.f32 %v991, 0.0
    %v997 = vmul.f32 %v995, 1.442695
    %v998 = vpow.pop %v997
    %v999 = vmul.f32 %v996, 1.442695
    %v1000 = vpow.pop %v999
    %v1001 = vsub.f32 %v998, 1.0
    %v1002 = vsub.f32 %v1000, 1.0
    %v1003 = vsel %vm993, %v988, %v1001
    %v1004 = vsel %vm994, %v991, %v1002
    %v1005 = vadd.f32 %v1003, %v1004
    %v1006 = vrot.slane %v1005, 4
    %v1007 = vadd.f32 %v1005, %v1006
    %v1008 = vrot.slane %v1007, 2
    %v1009 = vadd.f32 %v1007, %v1008
    %v1010 = vrot.slane %v1009, 1
    %v1011 = vadd.f32 %v1009, %v1010
    %v1012 = vmul.f32 %v1011, %v438
    %v1013 = vsub.f32 %v1003, %v1012
    %v1014 = vsub.f32 %v1004, %v1012
    %v1015 = vmul.f32 %v1013, %v1013
    %v1016 = vmul.f32 %v1014, %v1014
    %v1017 = vadd.f32 %v1015, %v1016
    %v1018 = vrot.slane %v1017, 4
    %v1019 = vadd.f32 %v1017, %v1018
    %v1020 = vrot.slane %v1019, 2
    %v1021 = vadd.f32 %v1019, %v1020
    %v1022 = vrot.slane %v1021, 1
    %v1023 = vadd.f32 %v1021, %v1022
    %v1024 = vmul.f32 %v1023, %v438
    %v1025 = vadd.f32 %v1024, 1e-05
    %v1026 = vrsqrt.pop %v1025
    %v1027 = vmul.f32 %v1026, %v1025
    %v1028 = vmul.f32 %v1027, %v1026
    %v1029 = vmul.f32 0.5, %v1028
    %v1030 = vsub.f32 1.5, %v1029
    %v1031 = vmul.f32 %v1026, %v1030
    %vm1032 = vweird.f32 %v1025
    %vm1033 = vweird.f32 %v1026
    %vm1034 = vmor %vm1032, %vm1033
    %v1035 = vsel %vm1034, %v1026, %v1031
    %v1036 = vmul.f32 %v1013, %v1035
    %v1037 = vmul.f32 %v1014, %v1035
    %v1038 = vld [vmem:[%s43] sm:$0x1]
    %v1040 = vperm.slane %v1038, 0
    %v1042 = vmul.f32 %v1036, %v1040
    %v1043 = vmul.f32 %v1037, %v1040
    %v1044 = vld [vmem:[%s45] sm:$0x1]
    %v1046 = vperm.slane %v1044, 0
    %v1048 = vadd.f32 %v1042, %v1046
    %v1049 = vadd.f32 %v1043, %v1046
    %1050 = vmatpush.msra.mxu0 0.0
    %1051 = vmatpush.msra.mxu0 0.0
    %1052 = vmatpush.msra.mxu0 0.0
    %1053 = vmatpush.msra.mxu0 0.0
    %1054 = vmatpush.msra.mxu0 0.0
    %1055 = vmatpush.msra.mxu0 0.0
    %1056 = vmatpush.msra.mxu0 0.0
    %1057 = vmatpush.msra.mxu0 0.0
    %1058 = vmatpush.msra.mxu0 0.0
    %1059 = vmatpush.msra.mxu0 0.0
    %1060 = vmatpush.msra.mxu0 0.0
    %1061 = vmatpush.msra.mxu0 0.0
    %1062 = vmatpush.msra.mxu0 0.0
    %1063 = vmatpush.msra.mxu0 0.0
    %1064 = vmatpush.msra.mxu0 0.0
    %1065 = vmatpush.msra.mxu0 %v1048
    %1066 = vmatmul.f32.gmra.mxu0 %v479
    %v1067 = vpop.f32.mrf.mxu0
    %v1068 = vadd.f32 0.0, %v1067
    %1069 = vmatmul.f32.gmra.mxu0 %v482
    %v1070 = vpop.f32.mrf.mxu0
    %v1071 = vadd.f32 0.0, %v1070
    %1072 = vdwg.mxu0
    %1073 = vmatpush.msra.mxu0 0.0
    %1074 = vmatpush.msra.mxu0 0.0
    %1075 = vmatpush.msra.mxu0 0.0
    %1076 = vmatpush.msra.mxu0 0.0
    %1077 = vmatpush.msra.mxu0 0.0
    %1078 = vmatpush.msra.mxu0 0.0
    %1079 = vmatpush.msra.mxu0 0.0
    %1080 = vmatpush.msra.mxu0 0.0
    %1081 = vmatpush.msra.mxu0 0.0
    %1082 = vmatpush.msra.mxu0 0.0
    %1083 = vmatpush.msra.mxu0 0.0
    %1084 = vmatpush.msra.mxu0 0.0
    %1085 = vmatpush.msra.mxu0 0.0
    %1086 = vmatpush.msra.mxu0 0.0
    %1087 = vmatpush.msra.mxu0 0.0
    %1088 = vmatpush.msra.mxu0 %v1049
    %1089 = vmatmul.f32.gmra.mxu0 %v479
    %v1090 = vpop.f32.mrf.mxu0
    %v1091 = vadd.f32 0.0, %v1090
    %1092 = vmatmul.f32.gmra.mxu0 %v482
    %v1093 = vpop.f32.mrf.mxu0
    %v1094 = vadd.f32 0.0, %v1093
    %1095 = vdwg.mxu0
    %1096 = vmatpush.msra.mxu0 0.0
    %1097 = vmatpush.msra.mxu0 0.0
    %1098 = vmatpush.msra.mxu0 0.0
    %1099 = vmatpush.msra.mxu0 0.0
    %1100 = vmatpush.msra.mxu0 0.0
    %1101 = vmatpush.msra.mxu0 0.0
    %1102 = vmatpush.msra.mxu0 0.0
    %1103 = vmatpush.msra.mxu0 0.0
    %1104 = vmatpush.msra.mxu0 0.0
    %1105 = vmatpush.msra.mxu0 0.0
    %1106 = vmatpush.msra.mxu0 0.0
    %1107 = vmatpush.msra.mxu0 0.0
    %1108 = vmatpush.msra.mxu0 0.0
    %1109 = vmatpush.msra.mxu0 0.0
    %1110 = vmatpush.msra.mxu0 0.0
    %1111 = vmatpush.msra.mxu0 %v1048
    %1112 = vmatmul.f32.gmra.mxu0 %v531
    %v1113 = vpop.f32.mrf.mxu0
    %v1114 = vadd.f32 0.0, %v1113
    %1115 = vmatmul.f32.gmra.mxu0 %v534
    %v1116 = vpop.f32.mrf.mxu0
    %v1117 = vadd.f32 0.0, %v1116
    %1118 = vdwg.mxu0
    %1119 = vmatpush.msra.mxu0 0.0
    %1120 = vmatpush.msra.mxu0 0.0
    %1121 = vmatpush.msra.mxu0 0.0
    %1122 = vmatpush.msra.mxu0 0.0
    %1123 = vmatpush.msra.mxu0 0.0
    %1124 = vmatpush.msra.mxu0 0.0
    %1125 = vmatpush.msra.mxu0 0.0
    %1126 = vmatpush.msra.mxu0 0.0
    %1127 = vmatpush.msra.mxu0 0.0
    %1128 = vmatpush.msra.mxu0 0.0
    %1129 = vmatpush.msra.mxu0 0.0
    %1130 = vmatpush.msra.mxu0 0.0
    %1131 = vmatpush.msra.mxu0 0.0
    %1132 = vmatpush.msra.mxu0 0.0
    %1133 = vmatpush.msra.mxu0 0.0
    %1134 = vmatpush.msra.mxu0 %v1049
    %1135 = vmatmul.f32.gmra.mxu0 %v531
    %v1136 = vpop.f32.mrf.mxu0
    %v1137 = vadd.f32 0.0, %v1136
    %1138 = vmatmul.f32.gmra.mxu0 %v534
    %v1139 = vpop.f32.mrf.mxu0
    %v1140 = vadd.f32 0.0, %v1139
    %1141 = vdwg.mxu0
    %v1142 = vld [vmem:[%s53] sm:$0x1]
    %v1143 = vld [vmem:[#allocation13] sm:$0xff]
    %v1144 = vld [vmem:[#allocation13 + $0x8] sm:$0xff]
    %v1145 = vld [vmem:[#allocation13 + $0x10] sm:$0xff]
    %v1146 = vld [vmem:[#allocation13 + $0x18] sm:$0xff]
    %v1147 = vld [vmem:[#allocation13 + $0x20] sm:$0xff]
    %v1148 = vld [vmem:[#allocation13 + $0x28] sm:$0xff]
    %v1149 = vld [vmem:[#allocation13 + $0x30] sm:$0xff]
    %v1150 = vld [vmem:[#allocation13 + $0x38] sm:$0xff]
    %v1151 = vld [vmem:[#allocation13 + $0x40] sm:$0xff]
    %v1152 = vld [vmem:[#allocation13 + $0x48] sm:$0xff]
    %v1153 = vld [vmem:[#allocation13 + $0x50] sm:$0xff]
    %v1154 = vld [vmem:[#allocation13 + $0x58] sm:$0xff]
    %v1155 = vld [vmem:[#allocation13 + $0x60] sm:$0xff]
    %v1156 = vld [vmem:[#allocation13 + $0x68] sm:$0xff]
    %v1157 = vld [vmem:[#allocation13 + $0x70] sm:$0xff]
    %v1158 = vld [vmem:[#allocation13 + $0x78] sm:$0xff]
    %1159 = vmatpush.msra.mxu0 %v1158
    %1160 = vmatpush.msra.mxu0 %v1157
    %1161 = vmatpush.msra.mxu0 %v1156
    %1162 = vmatpush.msra.mxu0 %v1155
    %1163 = vmatpush.msra.mxu0 %v1154
    %1164 = vmatpush.msra.mxu0 %v1153
    %1165 = vmatpush.msra.mxu0 %v1152
    %1166 = vmatpush.msra.mxu0 %v1151
    %1167 = vmatpush.msra.mxu0 %v1150
    %1168 = vmatpush.msra.mxu0 %v1149
    %1169 = vmatpush.msra.mxu0 %v1148
    %1170 = vmatpush.msra.mxu0 %v1147
    %1171 = vmatpush.msra.mxu0 %v1146
    %1172 = vmatpush.msra.mxu0 %v1145
    %1173 = vmatpush.msra.mxu0 %v1144
    %1174 = vmatpush.msra.mxu0 %v1143
    %1175 = vmatmul.f32.gmra.mxu0 %v1068
    %v1176 = vpop.f32.mrf.mxu0
    %v1177 = vadd.f32 0.0, %v1176
    %1178 = vmatmul.f32.gmra.mxu0 %v1071
    %v1179 = vpop.f32.mrf.mxu0
    %v1180 = vadd.f32 0.0, %v1179
    %1181 = vmatmul.f32.gmra.mxu0 %v1091
    %v1182 = vpop.f32.mrf.mxu0
    %v1183 = vadd.f32 0.0, %v1182
    %1184 = vmatmul.f32.gmra.mxu0 %v1094
    %v1185 = vpop.f32.mrf.mxu0
    %v1186 = vadd.f32 0.0, %v1185
    %1187 = vdwg.mxu0
    %v1189 = vperm.slane %v1142, 0
    %v1191 = vadd.f32 %v1189, %v1177
    %v1192 = vadd.f32 %v1189, %v1180
    %v1193 = vadd.f32 %v1189, %v1183
    %v1194 = vadd.f32 %v1189, %v1186
    %v1195 = vld [vmem:[#allocation14] sm:$0xff]
    %v1196 = vld [vmem:[#allocation14 + $0x8] sm:$0xff]
    %v1197 = vld [vmem:[#allocation14 + $0x10] sm:$0xff]
    %v1198 = vld [vmem:[#allocation14 + $0x18] sm:$0xff]
    %v1199 = vld [vmem:[#allocation14 + $0x20] sm:$0xff]
    %v1200 = vld [vmem:[#allocation14 + $0x28] sm:$0xff]
    %v1201 = vld [vmem:[#allocation14 + $0x30] sm:$0xff]
    %v1202 = vld [vmem:[#allocation14 + $0x38] sm:$0xff]
    %v1203 = vld [vmem:[#allocation14 + $0x40] sm:$0xff]
    %v1204 = vld [vmem:[#allocation14 + $0x48] sm:$0xff]
    %v1205 = vld [vmem:[#allocation14 + $0x50] sm:$0xff]
    %v1206 = vld [vmem:[#allocation14 + $0x58] sm:$0xff]
    %v1207 = vld [vmem:[#allocation14 + $0x60] sm:$0xff]
    %v1208 = vld [vmem:[#allocation14 + $0x68] sm:$0xff]
    %v1209 = vld [vmem:[#allocation14 + $0x70] sm:$0xff]
    %v1210 = vld [vmem:[#allocation14 + $0x78] sm:$0xff]
    %1211 = vmatpush.msra.mxu0 %v1210
    %1212 = vmatpush.msra.mxu0 %v1209
    %1213 = vmatpush.msra.mxu0 %v1208
    %1214 = vmatpush.msra.mxu0 %v1207
    %1215 = vmatpush.msra.mxu0 %v1206
    %1216 = vmatpush.msra.mxu0 %v1205
    %1217 = vmatpush.msra.mxu0 %v1204
    %1218 = vmatpush.msra.mxu0 %v1203
    %1219 = vmatpush.msra.mxu0 %v1202
    %1220 = vmatpush.msra.mxu0 %v1201
    %1221 = vmatpush.msra.mxu0 %v1200
    %1222 = vmatpush.msra.mxu0 %v1199
    %1223 = vmatpush.msra.mxu0 %v1198
    %1224 = vmatpush.msra.mxu0 %v1197
    %1225 = vmatpush.msra.mxu0 %v1196
    %1226 = vmatpush.msra.mxu0 %v1195
    %1227 = vmatmul.f32.gmra.mxu0 %v1114
    %v1228 = vpop.f32.mrf.mxu0
    %v1229 = vadd.f32 0.0, %v1228
    %1230 = vmatmul.f32.gmra.mxu0 %v1117
    %v1231 = vpop.f32.mrf.mxu0
    %v1232 = vadd.f32 0.0, %v1231
    %1233 = vmatmul.f32.gmra.mxu0 %v1137
    %v1234 = vpop.f32.mrf.mxu0
    %v1235 = vadd.f32 0.0, %v1234
    %1236 = vmatmul.f32.gmra.mxu0 %v1140
    %v1237 = vpop.f32.mrf.mxu0
    %v1238 = vadd.f32 0.0, %v1237
    %1239 = vdwg.mxu0
    %v1240 = vadd.f32 %v1191, %v1229
    %v1241 = vadd.f32 %v1192, %v1232
    %v1242 = vadd.f32 %v1193, %v1235
    %v1243 = vadd.f32 %v1194, %v1238
    %v1244 = vld [vmem:[#allocation16] sm:$0xff]
    %v1245 = vld [vmem:[#allocation16 + $0x8] sm:$0xff]
    %v1246 = vld [vmem:[#allocation16 + $0x10] sm:$0xff]
    %v1247 = vld [vmem:[#allocation16 + $0x18] sm:$0xff]
    %v1248 = vld [vmem:[#allocation16 + $0x20] sm:$0xff]
    %v1249 = vld [vmem:[#allocation16 + $0x28] sm:$0xff]
    %v1250 = vld [vmem:[#allocation16 + $0x30] sm:$0xff]
    %v1251 = vld [vmem:[#allocation16 + $0x38] sm:$0xff]
    %v1252 = vld [vmem:[#allocation16 + $0x40] sm:$0xff]
    %v1253 = vld [vmem:[#allocation16 + $0x48] sm:$0xff]
    %v1254 = vld [vmem:[#allocation16 + $0x50] sm:$0xff]
    %v1255 = vld [vmem:[#allocation16 + $0x58] sm:$0xff]
    %v1256 = vld [vmem:[#allocation16 + $0x60] sm:$0xff]
    %v1257 = vld [vmem:[#allocation16 + $0x68] sm:$0xff]
    %v1258 = vld [vmem:[#allocation16 + $0x70] sm:$0xff]
    %v1259 = vld [vmem:[#allocation16 + $0x78] sm:$0xff]
    %1260 = vmatpush.msra.mxu0 %v1259
    %1261 = vmatpush.msra.mxu0 %v1258
    %1262 = vmatpush.msra.mxu0 %v1257
    %1263 = vmatpush.msra.mxu0 %v1256
    %1264 = vmatpush.msra.mxu0 %v1255
    %1265 = vmatpush.msra.mxu0 %v1254
    %1266 = vmatpush.msra.mxu0 %v1253
    %1267 = vmatpush.msra.mxu0 %v1252
    %1268 = vmatpush.msra.mxu0 %v1251
    %1269 = vmatpush.msra.mxu0 %v1250
    %1270 = vmatpush.msra.mxu0 %v1249
    %1271 = vmatpush.msra.mxu0 %v1248
    %1272 = vmatpush.msra.mxu0 %v1247
    %1273 = vmatpush.msra.mxu0 %v1246
    %1274 = vmatpush.msra.mxu0 %v1245
    %1275 = vmatpush.msra.mxu0 %v1244
    %1276 = vmatmul.f32.gmra.mxu0 %v843
    %v1277 = vpop.f32.mrf.mxu0
    %v1278 = vadd.f32 0.0, %v1277
    %1279 = vmatmul.f32.gmra.mxu0 %v844
    %v1280 = vpop.f32.mrf.mxu0
    %v1281 = vadd.f32 0.0, %v1280
    %1282 = vmatmul.f32.gmra.mxu0 %v845
    %v1283 = vpop.f32.mrf.mxu0
    %v1284 = vadd.f32 0.0, %v1283
    %1285 = vmatmul.f32.gmra.mxu0 %v846
    %v1286 = vpop.f32.mrf.mxu0
    %v1287 = vadd.f32 0.0, %v1286
    %1288 = vdwg.mxu0
    %v1289 = vadd.f32 %v1240, %v1278
    %v1290 = vadd.f32 %v1241, %v1281
    %v1291 = vadd.f32 %v1242, %v1284
    %v1292 = vadd.f32 %v1243, %v1287
    %vm1293 = vcmp.gt.f32.partialorder %v1289, 0.0
    %vm1294 = vcmp.gt.f32.partialorder %v1290, 0.0
    %vm1295 = vcmp.gt.f32.partialorder %v1291, 0.0
    %vm1296 = vcmp.gt.f32.partialorder %v1292, 0.0
    %v1297 = vmin.f32 %v1289, 0.0
    %v1298 = vmin.f32 %v1290, 0.0
    %v1299 = vmin.f32 %v1291, 0.0
    %v1300 = vmin.f32 %v1292, 0.0
    %v1301 = vmul.f32 %v1297, 1.442695
    %v1302 = vpow.pop %v1301
    %v1303 = vmul.f32 %v1298, 1.442695
    %v1304 = vpow.pop %v1303
    %v1305 = vmul.f32 %v1299, 1.442695
    %v1306 = vpow.pop %v1305
    %v1307 = vmul.f32 %v1300, 1.442695
    %v1308 = vpow.pop %v1307
    %v1309 = vsub.f32 %v1302, 1.0
    %v1310 = vsub.f32 %v1304, 1.0
    %v1311 = vsub.f32 %v1306, 1.0
    %v1312 = vsub.f32 %v1308, 1.0
    %v1313 = vsel %vm1293, %v1289, %v1309
    %v1314 = vsel %vm1294, %v1290, %v1310
    %v1315 = vsel %vm1295, %v1291, %v1311
    %v1316 = vsel %vm1296, %v1292, %v1312
    %v1317 = vld [vmem:[#allocation17] sm:$0xff]
    %v1318 = vld [vmem:[#allocation17 + $0x8] sm:$0xff]
    %v1319 = vld [vmem:[#allocation17 + $0x10] sm:$0xff]
    %v1320 = vld [vmem:[#allocation17 + $0x18] sm:$0xff]
    %v1321 = vld [vmem:[#allocation17 + $0x20] sm:$0xff]
    %v1322 = vld [vmem:[#allocation17 + $0x28] sm:$0xff]
    %v1323 = vld [vmem:[#allocation17 + $0x30] sm:$0xff]
    %v1324 = vld [vmem:[#allocation17 + $0x38] sm:$0xff]
    %v1325 = vld [vmem:[#allocation17 + $0x40] sm:$0xff]
    %v1326 = vld [vmem:[#allocation17 + $0x48] sm:$0xff]
    %v1327 = vld [vmem:[#allocation17 + $0x50] sm:$0xff]
    %v1328 = vld [vmem:[#allocation17 + $0x58] sm:$0xff]
    %v1329 = vld [vmem:[#allocation17 + $0x60] sm:$0xff]
    %v1330 = vld [vmem:[#allocation17 + $0x68] sm:$0xff]
    %v1331 = vld [vmem:[#allocation17 + $0x70] sm:$0xff]
    %v1332 = vld [vmem:[#allocation17 + $0x78] sm:$0xff]
    %v1333 = vld [vmem:[%s57] sm:$0x1]
    %v1335 = vperm.slane %v1333, 0
    %1337 = vmatpush.msra.mxu0 %v1332
    %1338 = vmatpush.msra.mxu0 %v1331
    %1339 = vmatpush.msra.mxu0 %v1330
    %1340 = vmatpush.msra.mxu0 %v1329
    %1341 = vmatpush.msra.mxu0 %v1328
    %1342 = vmatpush.msra.mxu0 %v1327
    %1343 = vmatpush.msra.mxu0 %v1326
    %1344 = vmatpush.msra.mxu0 %v1325
    %1345 = vmatpush.msra.mxu0 %v1324
    %1346 = vmatpush.msra.mxu0 %v1323
    %1347 = vmatpush.msra.mxu0 %v1322
    %1348 = vmatpush.msra.mxu0 %v1321
    %1349 = vmatpush.msra.mxu0 %v1320
    %1350 = vmatpush.msra.mxu0 %v1319
    %1351 = vmatpush.msra.mxu0 %v1318
    %1352 = vmatpush.msra.mxu0 %v1317
    %1353 = vmatmul.f32.gmra.mxu0 %v1313
    %v1354 = vpop.f32.mrf.mxu0
    %v1355 = vadd.f32 %v1335, %v1354
    %1356 = vmatmul.f32.gmra.mxu0 %v1314
    %v1357 = vpop.f32.mrf.mxu0
    %v1358 = vadd.f32 %v1335, %v1357
    %1359 = vmatmul.f32.gmra.mxu0 %v1315
    %v1360 = vpop.f32.mrf.mxu0
    %v1361 = vadd.f32 %v1335, %v1360
    %1362 = vmatmul.f32.gmra.mxu0 %v1316
    %v1363 = vpop.f32.mrf.mxu0
    %v1364 = vadd.f32 %v1335, %v1363
    %1365 = vdwg.mxu0
    %vm1366 = vcmp.gt.f32.partialorder %v1355, 0.0
    %vm1367 = vcmp.gt.f32.partialorder %v1358, 0.0
    %vm1368 = vcmp.gt.f32.partialorder %v1361, 0.0
    %vm1369 = vcmp.gt.f32.partialorder %v1364, 0.0
    %v1370 = vmin.f32 %v1355, 0.0
    %v1371 = vmin.f32 %v1358, 0.0
    %v1372 = vmin.f32 %v1361, 0.0
    %v1373 = vmin.f32 %v1364, 0.0
    %v1374 = vmul.f32 %v1370, 1.442695
    %v1375 = vpow.pop %v1374
    %v1376 = vmul.f32 %v1371, 1.442695
    %v1377 = vpow.pop %v1376
    %v1378 = vmul.f32 %v1372, 1.442695
    %v1379 = vpow.pop %v1378
    %v1380 = vmul.f32 %v1373, 1.442695
    %v1381 = vpow.pop %v1380
    %v1382 = vsub.f32 %v1375, 1.0
    %v1383 = vsub.f32 %v1377, 1.0
    %v1384 = vsub.f32 %v1379, 1.0
    %v1385 = vsub.f32 %v1381, 1.0
    %v1386 = vsel %vm1366, %v1355, %v1382
    %v1387 = vsel %vm1367, %v1358, %v1383
    %v1388 = vsel %vm1368, %v1361, %v1384
    %v1389 = vsel %vm1369, %v1364, %v1385
    %v1390 = vadd.f32 %v1386, %v1387
    %v1391 = vadd.f32 %v1390, %v1388
    %v1392 = vadd.f32 %v1391, %v1389
    %v1393 = vrot.slane %v1392, 4
    %v1394 = vadd.f32 %v1392, %v1393
    %v1395 = vrot.slane %v1394, 2
    %v1396 = vadd.f32 %v1394, %v1395
    %v1397 = vrot.slane %v1396, 1
    %v1398 = vadd.f32 %v1396, %v1397
    %v1399 = vmul.f32 %v1398, %v796
    %v1400 = vsub.f32 %v1386, %v1399
    %v1401 = vsub.f32 %v1387, %v1399
    %v1402 = vsub.f32 %v1388, %v1399
    %v1403 = vsub.f32 %v1389, %v1399
    %v1404 = vmul.f32 %v1400, %v1400
    %v1405 = vmul.f32 %v1401, %v1401
    %v1406 = vmul.f32 %v1402, %v1402
    %v1407 = vmul.f32 %v1403, %v1403
    %v1408 = vadd.f32 %v1404, %v1405
    %v1409 = vadd.f32 %v1408, %v1406
    %v1410 = vadd.f32 %v1409, %v1407
    %v1411 = vrot.slane %v1410, 4
    %v1412 = vadd.f32 %v1410, %v1411
    %v1413 = vrot.slane %v1412, 2
    %v1414 = vadd.f32 %v1412, %v1413
    %v1415 = vrot.slane %v1414, 1
    %v1416 = vadd.f32 %v1414, %v1415
    %v1417 = vmul.f32 %v1416, %v796
    %v1418 = vadd.f32 %v1417, 1e-05
    %v1419 = vrsqrt.pop %v1418
    %v1420 = vmul.f32 %v1419, %v1418
    %v1421 = vmul.f32 %v1420, %v1419
    %v1422 = vmul.f32 0.5, %v1421
    %v1423 = vsub.f32 1.5, %v1422
    %v1424 = vmul.f32 %v1419, %v1423
    %vm1425 = vweird.f32 %v1418
    %vm1426 = vweird.f32 %v1419
    %vm1427 = vmor %vm1425, %vm1426
    %v1428 = vsel %vm1427, %v1419, %v1424
    %v1429 = vmul.f32 %v1400, %v1428
    %v1430 = vmul.f32 %v1401, %v1428
    %v1431 = vmul.f32 %v1402, %v1428
    %v1432 = vmul.f32 %v1403, %v1428
    %v1433 = vld [vmem:[%s59] sm:$0x1]
    %v1435 = vperm.slane %v1433, 0
    %v1437 = vmul.f32 %v1429, %v1435
    %v1438 = vmul.f32 %v1430, %v1435
    %v1439 = vmul.f32 %v1431, %v1435
    %v1440 = vmul.f32 %v1432, %v1435
    %v1441 = vld [vmem:[%s61] sm:$0x1]
    %v1443 = vperm.slane %v1441, 0
    %v1445 = vadd.f32 %v1437, %v1443
    %v1446 = vadd.f32 %v1438, %v1443
    %v1447 = vadd.f32 %v1439, %v1443
    %v1448 = vadd.f32 %v1440, %v1443
    %v1449 = vld [vmem:[#allocation19] sm:$0xff]
    %v1450 = vld [vmem:[#allocation19 + $0x8] sm:$0xff]
    %v1451 = vld [vmem:[#allocation19 + $0x10] sm:$0xff]
    %v1452 = vld [vmem:[#allocation19 + $0x18] sm:$0xff]
    %v1453 = vld [vmem:[#allocation19 + $0x20] sm:$0xff]
    %v1454 = vld [vmem:[#allocation19 + $0x28] sm:$0xff]
    %v1455 = vld [vmem:[#allocation19 + $0x30] sm:$0xff]
    %v1456 = vld [vmem:[#allocation19 + $0x38] sm:$0xff]
    %v1457 = vld [vmem:[#allocation19 + $0x40] sm:$0xff]
    %v1458 = vld [vmem:[#allocation19 + $0x48] sm:$0xff]
    %v1459 = vld [vmem:[#allocation19 + $0x50] sm:$0xff]
    %v1460 = vld [vmem:[#allocation19 + $0x58] sm:$0xff]
    %v1461 = vld [vmem:[#allocation19 + $0x60] sm:$0xff]
    %v1462 = vld [vmem:[#allocation19 + $0x68] sm:$0xff]
    %v1463 = vld [vmem:[#allocation19 + $0x70] sm:$0xff]
    %v1464 = vld [vmem:[#allocation19 + $0x78] sm:$0xff]
    %v1465 = vld [vmem:[%s65] sm:$0x1]
    %v1467 = vperm.slane %v1465, 0
    %1469 = vmatpush.msra.mxu0 %v1464
    %1470 = vmatpush.msra.mxu0 %v1463
    %1471 = vmatpush.msra.mxu0 %v1462
    %1472 = vmatpush.msra.mxu0 %v1461
    %1473 = vmatpush.msra.mxu0 %v1460
    %1474 = vmatpush.msra.mxu0 %v1459
    %1475 = vmatpush.msra.mxu0 %v1458
    %1476 = vmatpush.msra.mxu0 %v1457
    %1477 = vmatpush.msra.mxu0 %v1456
    %1478 = vmatpush.msra.mxu0 %v1455
    %1479 = vmatpush.msra.mxu0 %v1454
    %1480 = vmatpush.msra.mxu0 %v1453
    %1481 = vmatpush.msra.mxu0 %v1452
    %1482 = vmatpush.msra.mxu0 %v1451
    %1483 = vmatpush.msra.mxu0 %v1450
    %1484 = vmatpush.msra.mxu0 %v1449
    %1485 = vmatmul.f32.gmra.mxu0 %v1445
    %v1486 = vpop.f32.mrf.mxu0
    %v1487 = vadd.f32 %v1467, %v1486
    %1488 = vmatmul.f32.gmra.mxu0 %v1446
    %v1489 = vpop.f32.mrf.mxu0
    %v1490 = vadd.f32 %v1467, %v1489
    %1491 = vmatmul.f32.gmra.mxu0 %v1447
    %v1492 = vpop.f32.mrf.mxu0
    %v1493 = vadd.f32 %v1467, %v1492
    %1494 = vmatmul.f32.gmra.mxu0 %v1448
    %v1495 = vpop.f32.mrf.mxu0
    %v1496 = vadd.f32 %v1467, %v1495
    %1497 = vdwg.mxu0
    %1498 = vst [vmem:[#allocation20] sm:$0xff] %v1487
    %1499 = vst [vmem:[#allocation20 + $0x8] sm:$0xff] %v1490
    %1500 = vst [vmem:[#allocation20 + $0x10] sm:$0xff] %v1493
    %1501 = vst [vmem:[#allocation20 + $0x18] sm:$0xff] %v1496
    // Predicated region
    $region178: #{tpu_custom_call.1} parent=1 // pred_check
      _
    $region179: #{tpu_custom_call.1} parent=1 // pred_check_branch
      %1503 = sbr.rel (0) target = $region181
    $region180: #{tpu_custom_call.1} parent=1 // pred_region
      %1505 = vsyncadd [#allocation4], 0
      %s1506 = sshll.u32 [#allocation20], 4
      %s1507 = int_to_ptr.vmem [resolvable:$true] %s1506
      %s1508 = sshll.u32 %s67, 4
      %s1509 = int_to_ptr.hbm [resolvable:$true] %s1508
      %1514 = dma.vmem_to_hbm [thread:$0]  %s1507, 512, %s1509, [#allocation4], 128, 128, 8
    $region181: #{tpu_custom_call.1} parent=1 // pred_fallthru
      _
    // Predicated region
    $region182: #{tpu_custom_call.1} parent=1 // pred_check
      _
    $region183: #{tpu_custom_call.1} parent=1 // pred_check_branch
      %1516 = sbr.rel (0) target = $region185
    $region184: #{tpu_custom_call.1} parent=1 // pred_region
      %1518 = dma.done [#allocation4], 512
    $region185: #{tpu_custom_call.1} parent=1 // pred_fallthru
      _
    %1519 = vsyncpa [#allocation3], 1
    %1520 = vsyncpa [#allocation6], 1
    %1521 = vsyncpa [#allocation9], 1
    %1522 = vsyncpa [#allocation12], 1
    %1523 = vsyncpa [#allocation15], 1
    %1524 = vsyncpa [#allocation18], 1
    %1525 = vsyncpa [#allocation4], 1

</llo_original>
